<compile_context>
chip_gen: v6e
topology: v6e:2x2x1
jax: 0.10.0
libtpu: 0.0.40
codegen_flags: <defaults>
</compile_context>

<pallas_src>
import jax
import jax.numpy as jnp
from jax.experimental import pallas as pl
from jax.experimental.pallas import tpu as pltpu

INPUT_DIM = 5
HIDDEN_DIMS = [128, 128, 64, 32]
DIMS = [INPUT_DIM] + HIDDEN_DIMS + [1]                    # [5, 128, 128, 64, 32, 1]
IN_DIMS = DIMS[:-1]                                       # per-layer fan-in
OUT_DIMS = DIMS[1:]                                       # per-layer fan-out
N_LAYERS = len(OUT_DIMS)                                  # 5
ROW_OFF = [sum(OUT_DIMS[:i]) for i in range(N_LAYERS)]    # [0, 128, 256, 320, 352]
TOTAL_ROWS = sum(OUT_DIMS)                                # 353
MAX_IN = max(IN_DIMS)                                     # 128
K1_PAD = 8                                                # layer-1 fan-in padded 5 -> 8 for the MXU
W5T_OFF = ((TOTAL_ROWS + 7) // 8) * 8                     # 360: 8-aligned row offset of w_out^T
BPACK_ROWS = W5T_OFF + IN_DIMS[-1]                        # 392: biases + transposed output weight
TILE_B_MAX = 2048                                         # default max lane-dense batch tile


def _round_up(n, m):
    return ((n + m - 1) // m) * m


def _pick_tile_b(batch, tile_b_max):
    """Adaptive batch tile: lane-multiple, minimal padding for small B, and >= 2 tiles
    whenever possible so the 'parallel' grid axis can shard across v7x's 2 TensorCores."""
    tb = _round_up(max(1, pl.cdiv(batch, 2)), 128)
    return int(min(tile_b_max, max(128, tb)))


def _sigmoid(z):
    # Single transcendental per element (EUP tanh) instead of exp + reciprocal:
    # halves pressure on the EUP slot, the saturating unit for this network.
    return 0.5 * jnp.tanh(0.5 * z) + 0.5


def _ann_kernel(x_ref, w_ref, b_ref, o_ref):
    """One batch tile.

    x_ref: (K1_PAD, TILE_B)   input tile, batch on lanes, fan-in padded 5 -> 8 with zeros.
    w_ref: (TOTAL_ROWS, MAX_IN) packed weights; layer i at rows ROW_OFF[i]:+OUT_DIMS[i],
           cols 0:IN_DIMS[i], stored (out, in); zero-padded elsewhere.
    b_ref: (BPACK_ROWS, 1)    packed biases (rows 0:TOTAL_ROWS) plus the transposed
                              output-layer weight (rows W5T_OFF:W5T_OFF+32).
    o_ref: (1, TILE_B)        output tile (lane-dense store).
    """
    x = x_ref[...]                                                   # (8, TILE_B) f32

    # ---- Layer 1 on the MXU: (128, 8) @ (8, TILE_B); padded rows/cols are zero.
    w1 = w_ref[ROW_OFF[0]:ROW_OFF[0] + OUT_DIMS[0], 0:K1_PAD]        # (128, 8)
    b1 = b_ref[ROW_OFF[0]:ROW_OFF[0] + OUT_DIMS[0], :]               # (128, 1)
    h = _sigmoid(jnp.dot(w1, x, preferred_element_type=jnp.float32) + b1)

    # ---- Hidden layers 2..4 on the MXU, f32 accumulation, activations (n_out, TILE_B).
    for li in range(1, N_LAYERS - 1):
        off, n_out, n_in = ROW_OFF[li], OUT_DIMS[li], IN_DIMS[li]
        w = w_ref[off:off + n_out, 0:n_in]                           # (n_out, n_in)
        b = b_ref[off:off + n_out, :]                                # (n_out, 1)
        h = _sigmoid(jnp.dot(w, h, preferred_element_type=jnp.float32) + b)

    # ---- Output layer (1 x 32) on the VPU/XLU: broadcast multiply + sublane reduce.
    # Keeps an M=1 MXU push/drain off the tail of the dependency chain.
    w_out_t = b_ref[W5T_OFF:W5T_OFF + IN_DIMS[-1], :]                # (32, 1)
    b_out = b_ref[ROW_OFF[-1]:ROW_OFF[-1] + 1, :]                    # (1, 1)
    z = jnp.sum(w_out_t * h, axis=0, keepdims=True) + b_out          # (1, TILE_B)
    o_ref[...] = _sigmoid(z).astype(o_ref.dtype)


def _pack_params(params):
    """params = [w1, b1, ..., w5, b5] with w_i: (in, out), b_i: (1, out).

    Returns:
      wpack (TOTAL_ROWS, MAX_IN): weights in (out, in) layout, zero-padded.
      bpack (BPACK_ROWS, 1):      biases, plus w_out^T (32, 1) at rows W5T_OFF:+32.
    """
    wpack = jnp.zeros((TOTAL_ROWS, MAX_IN), jnp.float32)
    bpack = jnp.zeros((BPACK_ROWS, 1), jnp.float32)
    for i in range(N_LAYERS):
        w, b = params[2 * i], params[2 * i + 1]
        off, n_out, n_in = ROW_OFF[i], OUT_DIMS[i], IN_DIMS[i]
        wpack = wpack.at[off:off + n_out, 0:n_in].set(w.T.astype(jnp.float32))
        bpack = bpack.at[off:off + n_out, :].set(
            b.astype(jnp.float32).reshape(n_out, 1))
    # Output-layer weight, transposed to (32, 1), for the VPU/XLU final layer.
    w_out = params[2 * (N_LAYERS - 1)].astype(jnp.float32).reshape(IN_DIMS[-1], 1)
    bpack = bpack.at[W5T_OFF:W5T_OFF + IN_DIMS[-1], :].set(w_out)
    return wpack, bpack


def ann_forward(x, params, *, tile_b_max=TILE_B_MAX):
    """x: (B, INPUT_DIM) f32; params: flat list [w1, b1, ..., w5, b5]. Returns (B, 1)."""
    assert tile_b_max % 128 == 0, "tile_b_max must be a multiple of 128 (lane width)"
    B = x.shape[0]
    tile_b = _pick_tile_b(B, tile_b_max)
    n_tiles = pl.cdiv(B, tile_b)
    Bp = n_tiles * tile_b
    # One fused XLA pass: cast + pad batch B->Bp + pad fan-in 5->8 + transpose, so the
    # kernel sees a lane-dense (8, Bp) input (padded columns are discarded at the end).
    x_t = jnp.pad(x.astype(jnp.float32),
                  ((0, Bp - B), (0, K1_PAD - INPUT_DIM))).T            # (8, Bp)
    wpack, bpack = _pack_params(params)

    out = pl.pallas_call(
        _ann_kernel,
        out_shape=jax.ShapeDtypeStruct((1, Bp), jnp.float32),
        grid_spec=pltpu.PrefetchScalarGridSpec(
            num_scalar_prefetch=0,
            grid=(n_tiles,),
            in_specs=[
                pl.BlockSpec((K1_PAD, tile_b), lambda i: (0, i)),        # batch-tiled input
                pl.BlockSpec((TOTAL_ROWS, MAX_IN), lambda i: (0, 0)),    # resident weights
                pl.BlockSpec((BPACK_ROWS, 1), lambda i: (0, 0)),         # resident biases + w_out^T
            ],
            out_specs=pl.BlockSpec((1, tile_b), lambda i: (0, i)),
        ),
        compiler_params=pltpu.CompilerParams(
            dimension_semantics=("parallel",),          # shard batch tiles over v7x's 2 TCs
            vmem_limit_bytes=32 * 1024 * 1024,          # headroom for big tiles on v5e (16 MiB default)
        ),
    )(x_t, wpack, bpack)
    return out[0, :B].reshape(B, 1)


def init_params(key):
    """Deterministic init matching nn.Linear shapes (stored transposed: (in, out))."""
    params = []
    for i in range(N_LAYERS):
        fan_in, fan_out = DIMS[i], DIMS[i + 1]
        key, kw, kb = jax.random.split(key, 3)
        bound = 1.0 / jnp.sqrt(fan_in)
        w = jax.random.uniform(kw, (fan_in, fan_out), jnp.float32, -bound, bound)
        b = jax.random.uniform(kb, (1, fan_out), jnp.float32, -bound, bound)
        params.extend([w, b])
    return params


def ann_reference(x, params):
    """Plain-JAX reference (PyTorch forward: Linear -> Identity -> Sigmoid per layer,
    then Linear -> Sigmoid). Dropout is disabled (use_dropout=False default)."""
    h = x
    for i in range(0, len(params), 2):
        w, b = params[i], params[i + 1]
        h = jax.nn.sigmoid(h @ w + b)
    return h


if __name__ == "__main__":
    key = jax.random.PRNGKey(0)
    key, kx = jax.random.split(key)
    params = init_params(key)

    # Small batch: exercises adaptive tiling (tile_b=256, 2 tiles) + padding of the last tile.
    B = 300
    x = jax.random.normal(kx, (B, INPUT_DIM), dtype=jnp.float32)
    out = jax.block_until_ready(ann_forward(x, params))
    ref = ann_reference(x, params)
    assert out.shape == (B, 1), out.shape
    assert jnp.allclose(out, ref, atol=1e-4, rtol=1e-4), float(jnp.abs(out - ref).max())

    # Larger batch: exercises the full 2048-wide tile and a multi-tile grid.
    key, kx2 = jax.random.split(key)
    B2 = 4100
    x2 = jax.random.normal(kx2, (B2, INPUT_DIM), dtype=jnp.float32)
    out2 = jax.block_until_ready(ann_forward(x2, params))
    ref2 = ann_reference(x2, params)
    assert out2.shape == (B2, 1), out2.shape
    assert jnp.allclose(out2, ref2, atol=1e-4, rtol=1e-4), float(jnp.abs(out2 - ref2).max())

    print("KERNEL_OK")
</pallas_src>

<mosaic_0001>
module attributes {stable_mosaic.version = 11 : i64} {
  func.func @_ann_kernel(%arg0: i32, %arg1: memref<8x256xf32, #tpu.memory_space<vmem>>, %arg2: memref<353x128xf32, #tpu.memory_space<vmem>>, %arg3: memref<392x1xf32, #tpu.memory_space<vmem>>, %arg4: memref<1x256xf32, #tpu.memory_space<vmem>>) attributes {dimension_semantics = [#tpu.dimension_semantics<parallel>], iteration_bounds = array<i64: 2>, scalar_prefetch = 0 : i64, scratch_operands = 0 : i64, tpu.core_type = #tpu.core_type<tc>, window_params = [{transform_indices = @transform_0, window_bounds = array<i64: 8, 256>}, {pipeline_mode = #tpu.pipeline_mode<synchronous>, transform_indices = @transform_1, window_bounds = array<i64: 353, 128>}, {pipeline_mode = #tpu.pipeline_mode<synchronous>, transform_indices = @transform_2, window_bounds = array<i64: 392, 1>}, {transform_indices = @transform_3, window_bounds = array<i64: 1, 256>}]} {
    %c0 = arith.constant 0 : index
    %c0_0 = arith.constant 0 : index
    %0 = vector.load %arg1[%c0, %c0_0] : memref<8x256xf32, #tpu.memory_space<vmem>>, vector<8x256xf32>
    %c0_1 = arith.constant 0 : index
    %c0_2 = arith.constant 0 : index
    %1 = vector.load %arg2[%c0_1, %c0_2] : memref<353x128xf32, #tpu.memory_space<vmem>>, vector<128x8xf32>
    %c0_3 = arith.constant 0 : index
    %c0_4 = arith.constant 0 : index
    %2 = vector.load %arg3[%c0_3, %c0_4] : memref<392x1xf32, #tpu.memory_space<vmem>>, vector<128x1xf32>
    %cst = arith.constant dense<0.000000e+00> : vector<128x256xf32>
    %3 = tpu.matmul %1, %0, %cst {dimension_numbers = #tpu.dot_dimension_numbers<[1], [0], [0], [1], [0, 0, 1, 1], [], []>} : vector<128x8xf32>, vector<8x256xf32>, vector<128x256xf32> -> vector<128x256xf32>
    %4 = vector.broadcast %2 : vector<128x1xf32> to vector<128x256xf32>
    %5 = arith.addf %3, %4 : vector<128x256xf32>
    %cst_5 = arith.constant 5.000000e-01 : f32
    %6 = vector.broadcast %cst_5 : f32 to vector<128x256xf32>
    %7 = arith.mulf %6, %5 : vector<128x256xf32>
    %8 = math.tanh %7 : vector<128x256xf32>
    %cst_6 = arith.constant 5.000000e-01 : f32
    %9 = vector.broadcast %cst_6 : f32 to vector<128x256xf32>
    %10 = arith.mulf %9, %8 : vector<128x256xf32>
    %cst_7 = arith.constant 5.000000e-01 : f32
    %11 = vector.broadcast %cst_7 : f32 to vector<128x256xf32>
    %12 = arith.addf %10, %11 : vector<128x256xf32>
    %c128 = arith.constant 128 : index
    %c0_8 = arith.constant 0 : index
    %13 = vector.load %arg2[%c128, %c0_8] : memref<353x128xf32, #tpu.memory_space<vmem>>, vector<128x128xf32>
    %c128_9 = arith.constant 128 : index
    %c0_10 = arith.constant 0 : index
    %14 = vector.load %arg3[%c128_9, %c0_10] : memref<392x1xf32, #tpu.memory_space<vmem>>, vector<128x1xf32>
    %cst_11 = arith.constant dense<0.000000e+00> : vector<128x256xf32>
    %15 = tpu.matmul %13, %12, %cst_11 {dimension_numbers = #tpu.dot_dimension_numbers<[1], [0], [0], [1], [0, 0, 1, 1], [], []>} : vector<128x128xf32>, vector<128x256xf32>, vector<128x256xf32> -> vector<128x256xf32>
    %16 = vector.broadcast %14 : vector<128x1xf32> to vector<128x256xf32>
    %17 = arith.addf %15, %16 : vector<128x256xf32>
    %cst_12 = arith.constant 5.000000e-01 : f32
    %18 = vector.broadcast %cst_12 : f32 to vector<128x256xf32>
    %19 = arith.mulf %18, %17 : vector<128x256xf32>
    %20 = math.tanh %19 : vector<128x256xf32>
    %cst_13 = arith.constant 5.000000e-01 : f32
    %21 = vector.broadcast %cst_13 : f32 to vector<128x256xf32>
    %22 = arith.mulf %21, %20 : vector<128x256xf32>
    %cst_14 = arith.constant 5.000000e-01 : f32
    %23 = vector.broadcast %cst_14 : f32 to vector<128x256xf32>
    %24 = arith.addf %22, %23 : vector<128x256xf32>
    %c256 = arith.constant 256 : index
    %c0_15 = arith.constant 0 : index
    %25 = vector.load %arg2[%c256, %c0_15] : memref<353x128xf32, #tpu.memory_space<vmem>>, vector<64x128xf32>
    %c256_16 = arith.constant 256 : index
    %c0_17 = arith.constant 0 : index
    %26 = vector.load %arg3[%c256_16, %c0_17] : memref<392x1xf32, #tpu.memory_space<vmem>>, vector<64x1xf32>
    %cst_18 = arith.constant dense<0.000000e+00> : vector<64x256xf32>
    %27 = tpu.matmul %25, %24, %cst_18 {dimension_numbers = #tpu.dot_dimension_numbers<[1], [0], [0], [1], [0, 0, 1, 1], [], []>} : vector<64x128xf32>, vector<128x256xf32>, vector<64x256xf32> -> vector<64x256xf32>
    %28 = vector.broadcast %26 : vector<64x1xf32> to vector<64x256xf32>
    %29 = arith.addf %27, %28 : vector<64x256xf32>
    %cst_19 = arith.constant 5.000000e-01 : f32
    %30 = vector.broadcast %cst_19 : f32 to vector<64x256xf32>
    %31 = arith.mulf %30, %29 : vector<64x256xf32>
    %32 = math.tanh %31 : vector<64x256xf32>
    %cst_20 = arith.constant 5.000000e-01 : f32
    %33 = vector.broadcast %cst_20 : f32 to vector<64x256xf32>
    %34 = arith.mulf %33, %32 : vector<64x256xf32>
    %cst_21 = arith.constant 5.000000e-01 : f32
    %35 = vector.broadcast %cst_21 : f32 to vector<64x256xf32>
    %36 = arith.addf %34, %35 : vector<64x256xf32>
    %c320 = arith.constant 320 : index
    %c0_22 = arith.constant 0 : index
    %37 = vector.load %arg2[%c320, %c0_22] : memref<353x128xf32, #tpu.memory_space<vmem>>, vector<32x64xf32>
    %c320_23 = arith.constant 320 : index
    %c0_24 = arith.constant 0 : index
    %38 = vector.load %arg3[%c320_23, %c0_24] : memref<392x1xf32, #tpu.memory_space<vmem>>, vector<32x1xf32>
    %cst_25 = arith.constant dense<0.000000e+00> : vector<32x256xf32>
    %39 = tpu.matmul %37, %36, %cst_25 {dimension_numbers = #tpu.dot_dimension_numbers<[1], [0], [0], [1], [0, 0, 1, 1], [], []>} : vector<32x64xf32>, vector<64x256xf32>, vector<32x256xf32> -> vector<32x256xf32>
    %40 = vector.broadcast %38 : vector<32x1xf32> to vector<32x256xf32>
    %41 = arith.addf %39, %40 : vector<32x256xf32>
    %cst_26 = arith.constant 5.000000e-01 : f32
    %42 = vector.broadcast %cst_26 : f32 to vector<32x256xf32>
    %43 = arith.mulf %42, %41 : vector<32x256xf32>
    %44 = math.tanh %43 : vector<32x256xf32>
    %cst_27 = arith.constant 5.000000e-01 : f32
    %45 = vector.broadcast %cst_27 : f32 to vector<32x256xf32>
    %46 = arith.mulf %45, %44 : vector<32x256xf32>
    %cst_28 = arith.constant 5.000000e-01 : f32
    %47 = vector.broadcast %cst_28 : f32 to vector<32x256xf32>
    %48 = arith.addf %46, %47 : vector<32x256xf32>
    %c360 = arith.constant 360 : index
    %c0_29 = arith.constant 0 : index
    %49 = vector.load %arg3[%c360, %c0_29] : memref<392x1xf32, #tpu.memory_space<vmem>>, vector<32x1xf32>
    %c352 = arith.constant 352 : index
    %c0_30 = arith.constant 0 : index
    %50 = vector.load %arg3[%c352, %c0_30] : memref<392x1xf32, #tpu.memory_space<vmem>>, vector<1x1xf32>
    %51 = vector.broadcast %49 : vector<32x1xf32> to vector<32x256xf32>
    %52 = arith.mulf %51, %48 : vector<32x256xf32>
    %cst_31 = arith.constant dense<0.000000e+00> : vector<256xf32>
    %53 = vector.multi_reduction <add>, %52, %cst_31 [0] : vector<32x256xf32> to vector<256xf32>
    %54 = vector.shape_cast %53 : vector<256xf32> to vector<1x256xf32>
    %55 = vector.broadcast %50 : vector<1x1xf32> to vector<1x256xf32>
    %56 = arith.addf %54, %55 : vector<1x256xf32>
    %cst_32 = arith.constant 5.000000e-01 : f32
    %57 = vector.broadcast %cst_32 : f32 to vector<1x256xf32>
    %58 = arith.mulf %57, %56 : vector<1x256xf32>
    %59 = math.tanh %58 : vector<1x256xf32>
    %cst_33 = arith.constant 5.000000e-01 : f32
    %60 = vector.broadcast %cst_33 : f32 to vector<1x256xf32>
    %61 = arith.mulf %60, %59 : vector<1x256xf32>
    %cst_34 = arith.constant 5.000000e-01 : f32
    %62 = vector.broadcast %cst_34 : f32 to vector<1x256xf32>
    %63 = arith.addf %61, %62 : vector<1x256xf32>
    %c0_35 = arith.constant 0 : index
    %c0_36 = arith.constant 0 : index
    %64 = vector.load %arg4[%c0_35, %c0_36] : memref<1x256xf32, #tpu.memory_space<vmem>>, vector<1x256xf32>
    tpu.vector_store %arg4[%c0_35, %c0_36], %63 {strides = array<i32>} : memref<1x256xf32, #tpu.memory_space<vmem>>, vector<1x256xf32>,
    return
  }
  func.func @transform_0(%arg0: i32) -> (i32, i32) {
    %c0_i32 = arith.constant 0 : i32
    %c0_i32_0 = arith.constant 0 : i32
    return %c0_i32, %arg0 : i32, i32
  }
  func.func @transform_1(%arg0: i32) -> (i32, i32) {
    %c0_i32 = arith.constant 0 : i32
    %c0_i32_0 = arith.constant 0 : i32
    %c0_i32_1 = arith.constant 0 : i32
    return %c0_i32, %c0_i32_0 : i32, i32
  }
  func.func @transform_2(%arg0: i32) -> (i32, i32) {
    %c0_i32 = arith.constant 0 : i32
    %c0_i32_0 = arith.constant 0 : i32
    %c0_i32_1 = arith.constant 0 : i32
    return %c0_i32, %c0_i32_0 : i32, i32
  }
  func.func @transform_3(%arg0: i32) -> (i32, i32) {
    %c0_i32 = arith.constant 0 : i32
    %c0_i32_0 = arith.constant 0 : i32
    return %c0_i32, %arg0 : i32, i32
  }
}

</mosaic_0001>

<llo_original>
// kernel: tpu_custom_call.1
$region0: #{tpu_custom_call.1}
  #allocation0 [shape = 'u32[]', space=smem, size = 0x4, offset = 0x4, fixed_abs, tag = 'smem constant byte address 0x4 - core index']
  #allocation1 [shape = 'u32[144,128]{1,0:T(1,128)}', space=vmem, size = 0x12000, scoped, tag = 'internal scratch']
  %s0 = inlined_call_operand.vmem [shape: f32[8,512], index: 0, kind: input, shape index: {}]
  %s1 = inlined_call_operand.vmem [shape: f32[353,128], index: 1, kind: input, shape index: {}]
  %s2 = inlined_call_operand.vmem [shape: f32[392,1], index: 2, kind: input, shape index: {}]
  %s3 = inlined_call_operand.hbm [shape: f32[1,512], index: 3, kind: output, shape index: {}]
  %s4 = sld [smem:[#allocation0]]
  $region45: #{tpu_custom_call.1} parent=0
    _
  %s6 = ssub.s32 1, %s4
  %s7 = scalar_select 0, %s6, %s4
  $region1: #{tpu_custom_call.1} parent=0
    #allocation2 [shape = 'u8[2048]{0}', space=vmem, size = 0x800, scoped, tag = 'output window, operand 0']
    #allocation3 [shape = 's32[2]{0}', space=sflag, size = 0x8, scoped, tag = 'scoped memory for tpu_custom_call.1']
    %8 = vsyncpa [#allocation3], 0
    %s9 = scalar_lea.sflag [#allocation3], 1
    %10 = vsyncpa %s9, 0
    loop: start=0, step=1, limit=4
    $region2: #{tpu_custom_call.1} parent=1 // loop_pre_header
      _
    $region3: #{tpu_custom_call.1} parent=1 // loop_header
      %s12 = sphi 0, %s16
      %p13 = scmp.ge.s32.totalorder %s12, 4
      %s22 = sphi 0, %s24
      %s25 = sphi 0, %s22
      %s26 = sphi 0, %s25
      %s42 = sphi 0, %s26
      %s46 = sphi 0, %s46
      %s48 = sphi 0, %s46
      %s49 = sphi 0, %s48
      %s63 = sphi 0, %s49
      %s67 = sphi 0, %s67
      %s69 = sphi 0, %s67
      %s70 = sphi 0, %s69
      %s84 = sphi 0, %s70
      %s90 = sphi 0, %s92
      %s93 = sphi 0, %s90
      %s94 = sphi 0, %s93
      %s110 = sphi 0, %s94
    $region4: #{tpu_custom_call.1} parent=1 // loop_header_branch
      %15 = sbr.rel (%p13) target = $region8
    $region5: #{tpu_custom_call.1} parent=1 // loop_body
      %s17 = ssub.s32 %s12, 1
      %s18 = ssub.s32 %s12, 2
      %s19 = sadd.s32 %s12, 1
      %s20 = ssub.s32 %s12, %s19
      %p21 = scmp.eq.s32.totalorder %s20, 0
      %s23 = sadd.s32 %s22, 1
      %s24 = scalar_select %p21, %s22, %s23
      %p27 = pneg %p21
      %p28 = scmp.eq.s32.totalorder %s12, 1
      %p29 = por %p27, %p28
      %p30 = scmp.ne.s32.totalorder %s22, %s25
      %p31 = scmp.eq.s32.totalorder %s12, 0
      %p32 = por %p30, %p31
      %p33 = scmp.ne.s32.totalorder %s22, %s25
      %p34 = scmp.eq.s32.totalorder %s17, 1
      %p35 = por %p33, %p34
      %p36 = scmp.ne.s32.totalorder %s25, %s26
      %p37 = scmp.eq.s32.totalorder %s17, 0
      %p38 = por %p36, %p37
      %p39 = scmp.ne.s32.totalorder %s25, %s26
      %p40 = scmp.eq.s32.totalorder %s18, 1
      %p41 = por %p39, %p40
      %p43 = scmp.ne.s32.totalorder %s26, %s42
      %p44 = scmp.eq.s32.totalorder %s18, 0
      %p45 = por %p43, %p44
      %s47 = sadd.s32 %s46, 1
      %p50 = scmp.eq.s32.totalorder %s12, 1
      %p51 = scmp.ne.s32.totalorder %s46, %s48
      %p52 = scmp.eq.s32.totalorder %s12, 0
      %p53 = por %p51, %p52
      %p54 = scmp.ne.s32.totalorder %s46, %s48
      %p55 = scmp.eq.s32.totalorder %s17, 1
      %p56 = por %p54, %p55
      %p57 = scmp.ne.s32.totalorder %s48, %s49
      %p58 = scmp.eq.s32.totalorder %s17, 0
      %p59 = por %p57, %p58
      %p60 = scmp.ne.s32.totalorder %s48, %s49
      %p61 = scmp.eq.s32.totalorder %s18, 1
      %p62 = por %p60, %p61
      %p64 = scmp.ne.s32.totalorder %s49, %s63
      %p65 = scmp.eq.s32.totalorder %s18, 0
      %p66 = por %p64, %p65
      %s68 = sadd.s32 %s67, 1
      %p71 = scmp.eq.s32.totalorder %s12, 1
      %p72 = scmp.ne.s32.totalorder %s67, %s69
      %p73 = scmp.eq.s32.totalorder %s12, 0
      %p74 = por %p72, %p73
      %p75 = scmp.ne.s32.totalorder %s67, %s69
      %p76 = scmp.eq.s32.totalorder %s17, 1
      %p77 = por %p75, %p76
      %p78 = scmp.ne.s32.totalorder %s69, %s70
      %p79 = scmp.eq.s32.totalorder %s17, 0
      %p80 = por %p78, %p79
      %p81 = scmp.ne.s32.totalorder %s69, %s70
      %p82 = scmp.eq.s32.totalorder %s18, 1
      %p83 = por %p81, %p82
      %p85 = scmp.ne.s32.totalorder %s70, %s84
      %p86 = scmp.eq.s32.totalorder %s18, 0
      %p87 = por %p85, %p86
      %s88 = ssub.s32 %s12, %s19
      %p89 = scmp.eq.s32.totalorder %s88, 0
      %s91 = sadd.s32 %s90, 1
      %s92 = scalar_select %p89, %s90, %s91
      %p95 = pneg %p89
      %p96 = scmp.eq.s32.totalorder %s12, 1
      %p97 = por %p95, %p96
      %p98 = scmp.ne.s32.totalorder %s90, %s93
      %p99 = scmp.eq.s32.totalorder %s12, 0
      %p100 = por %p98, %p99
      %p101 = scmp.ne.s32.totalorder %s90, %s93
      %p102 = scmp.eq.s32.totalorder %s17, 1
      %p103 = por %p101, %p102
      %p104 = scmp.ne.s32.totalorder %s93, %s94
      %p105 = scmp.eq.s32.totalorder %s17, 0
      %p106 = por %p104, %p105
      %p107 = scmp.ne.s32.totalorder %s93, %s94
      %p108 = scmp.eq.s32.totalorder %s18, 1
      %p109 = por %p107, %p108
      %p111 = scmp.ne.s32.totalorder %s94, %s110
      %p112 = scmp.eq.s32.totalorder %s18, 0
      %p113 = por %p111, %p112
      %p114 = scmp.le.s32.totalorder 1, %s12
      %p115 = scmp.lt.s32.totalorder %s12, 3
      %p116 = pnand %p114, %p115
      %p117 = pneg %p116
      // Predicated region
      $region9: #{tpu_custom_call.1} parent=5 // pred_check
        _
      $region10: #{tpu_custom_call.1} parent=5 // pred_check_branch
        %119 = sbr.rel (%p116) target = $region12
      $region11: #{tpu_custom_call.1} parent=5 // pred_region
        %s120 = ssub.s32 %s12, 1
        // Predicated region
        $region13: #{tpu_custom_call.1} parent=11 // pred_check
          %p121 = pneg %p59
        $region14: #{tpu_custom_call.1} parent=11 // pred_check_branch
          %123 = sbr.rel (%p121) target = $region16
        $region15: #{tpu_custom_call.1} parent=11 // pred_region
          _
        $region16: #{tpu_custom_call.1} parent=11 // pred_fallthru
          _
        // Predicated region
        $region17: #{tpu_custom_call.1} parent=11 // pred_check
          %p124 = pneg %p80
        $region18: #{tpu_custom_call.1} parent=11 // pred_check_branch
          %126 = sbr.rel (%p124) target = $region20
        $region19: #{tpu_custom_call.1} parent=11 // pred_region
          _
        $region20: #{tpu_custom_call.1} parent=11 // pred_fallthru
          _
      $region12: #{tpu_custom_call.1} parent=5 // pred_fallthru
        _
      %p127 = scmp.lt.s32.totalorder %s12, 2
      // Predicated region
      $region21: #{tpu_custom_call.1} parent=5 // pred_check
        %p128 = pneg %p127
      $region22: #{tpu_custom_call.1} parent=5 // pred_check_branch
        %130 = sbr.rel (%p128) target = $region24
      $region23: #{tpu_custom_call.1} parent=5 // pred_region
        // Predicated region
        $region25: #{tpu_custom_call.1} parent=23 // pred_check
          %p131 = pneg %p32
        $region26: #{tpu_custom_call.1} parent=23 // pred_check_branch
          %133 = sbr.rel (%p131) target = $region28
        $region27: #{tpu_custom_call.1} parent=23 // pred_region
          %s134 = smul.u32 2, %s12
          %p135 = scmp.lt.s32.totalorder %s134, 3
          %s136 = scalar_select %p135, %s134, 3
          %s137 = smul.addr %s136, 8
          %s138 = scalar_lea.vmem %s0, %s137
          %s139 = smul.u32 2, %s12
        $region28: #{tpu_custom_call.1} parent=23 // pred_fallthru
          _
      $region24: #{tpu_custom_call.1} parent=5 // pred_fallthru
        _
      %p140 = scmp.le.s32.totalorder 1, %s12
      %p141 = scmp.lt.s32.totalorder %s12, 3
      %p142 = pnand %p140, %p141
      %p143 = pneg %p142
      // Predicated region
      $region29: #{tpu_custom_call.1} parent=5 // pred_check
        _
      $region30: #{tpu_custom_call.1} parent=5 // pred_check_branch
        %145 = sbr.rel (%p142) target = $region32
      $region31: #{tpu_custom_call.1} parent=5 // pred_region
        %s146 = ssub.s32 %s12, 1
        %s147 = smul.u32 2, %s17
        %p148 = scmp.lt.s32.totalorder %s147, 3
        %s149 = scalar_select %p148, %s147, 3
        %s150 = smul.addr %s149, 8
        %s151 = scalar_lea.vmem %s0, %s150
        %p152 = pneg %p38
        %p153 = pneg %p35
        %p154 = pneg %p59
        %p155 = pneg %p56
        %p156 = pneg %p80
        %p157 = pneg %p77
        %p158 = pneg %p106
        %p159 = pneg %p103
        %s160 = sand.u32 %s93, 1
        %s161 = scalar_lea.sflag [#allocation3], %s160
        %s162 = sand.u32 %s93, 1
        %s163 = smul.addr %s162, 2
        %s164 = scalar_lea.vmem [#allocation2], %s163
        %s165 = smul.u32 2, %s17
        %p166 = scmp.lt.s32.totalorder %s165, 3
        %s167 = scalar_select %p166, %s165, 3
        %s168 = smul.addr %s167, 8
        %s169 = scalar_lea.vmem %s0, %s168
        %s170 = smul.u32 2, %s17
        %s171 = smul.u32 2, %s17
        %v172 = vld [vmem:[%s169] sm:$0xff]
        %v173 = vld [vmem:[%s169 + $0x8] sm:$0xff]
        %v174 = vld [vmem:[%s1] sm:$0xff]
        %v175 = vld [vmem:[%s1 + $0x8] sm:$0xff]
        %v176 = vld [vmem:[%s1 + $0x10] sm:$0xff]
        %v177 = vld [vmem:[%s1 + $0x18] sm:$0xff]
        %v178 = vld [vmem:[%s1 + $0x20] sm:$0xff]
        %v179 = vld [vmem:[%s1 + $0x28] sm:$0xff]
        %v180 = vld [vmem:[%s1 + $0x30] sm:$0xff]
        %v181 = vld [vmem:[%s1 + $0x38] sm:$0xff]
        %v182 = vld [vmem:[%s1 + $0x40] sm:$0xff]
        %v183 = vld [vmem:[%s1 + $0x48] sm:$0xff]
        %v184 = vld [vmem:[%s1 + $0x50] sm:$0xff]
        %v185 = vld [vmem:[%s1 + $0x58] sm:$0xff]
        %v186 = vld [vmem:[%s1 + $0x60] sm:$0xff]
        %v187 = vld [vmem:[%s1 + $0x68] sm:$0xff]
        %v188 = vld [vmem:[%s1 + $0x70] sm:$0xff]
        %v189 = vld [vmem:[%s1 + $0x78] sm:$0xff]
        %v190 = vld [vmem:[%s2] sm:$0xff]
        %v191 = vld [vmem:[%s2 + $0x8] sm:$0xff]
        %v192 = vld [vmem:[%s2 + $0x10] sm:$0xff]
        %v193 = vld [vmem:[%s2 + $0x18] sm:$0xff]
        %v194 = vld [vmem:[%s2 + $0x20] sm:$0xff]
        %v195 = vld [vmem:[%s2 + $0x28] sm:$0xff]
        %v196 = vld [vmem:[%s2 + $0x30] sm:$0xff]
        %v197 = vld [vmem:[%s2 + $0x38] sm:$0xff]
        %v198 = vld [vmem:[%s2 + $0x40] sm:$0xff]
        %v199 = vld [vmem:[%s2 + $0x48] sm:$0xff]
        %v200 = vld [vmem:[%s2 + $0x50] sm:$0xff]
        %v201 = vld [vmem:[%s2 + $0x58] sm:$0xff]
        %v202 = vld [vmem:[%s2 + $0x60] sm:$0xff]
        %v203 = vld [vmem:[%s2 + $0x68] sm:$0xff]
        %v204 = vld [vmem:[%s2 + $0x70] sm:$0xff]
        %v205 = vld [vmem:[%s2 + $0x78] sm:$0xff]
        %207 = vset.pattern.permute.xlu0 0
        %208 = vperm.xlu0 %207, %v190
        %v209 = vpop.permute.xlu0 %208
        %212 = vset.pattern.permute.xlu0 0
        %213 = vperm.xlu0 %212, %v191
        %v214 = vpop.permute.xlu0 %213
        %217 = vset.pattern.permute.xlu0 0
        %218 = vperm.xlu0 %217, %v192
        %v219 = vpop.permute.xlu0 %218
        %222 = vset.pattern.permute.xlu0 0
        %223 = vperm.xlu0 %222, %v193
        %v224 = vpop.permute.xlu0 %223
        %227 = vset.pattern.permute.xlu0 0
        %228 = vperm.xlu0 %227, %v194
        %v229 = vpop.permute.xlu0 %228
        %232 = vset.pattern.permute.xlu0 0
        %233 = vperm.xlu0 %232, %v195
        %v234 = vpop.permute.xlu0 %233
        %237 = vset.pattern.permute.xlu0 0
        %238 = vperm.xlu0 %237, %v196
        %v239 = vpop.permute.xlu0 %238
        %242 = vset.pattern.permute.xlu0 0
        %243 = vperm.xlu0 %242, %v197
        %v244 = vpop.permute.xlu0 %243
        %247 = vset.pattern.permute.xlu0 0
        %248 = vperm.xlu0 %247, %v198
        %v249 = vpop.permute.xlu0 %248
        %252 = vset.pattern.permute.xlu0 0
        %253 = vperm.xlu0 %252, %v199
        %v254 = vpop.permute.xlu0 %253
        %257 = vset.pattern.permute.xlu0 0
        %258 = vperm.xlu0 %257, %v200
        %v259 = vpop.permute.xlu0 %258
        %262 = vset.pattern.permute.xlu0 0
        %263 = vperm.xlu0 %262, %v201
        %v264 = vpop.permute.xlu0 %263
        %267 = vset.pattern.permute.xlu0 0
        %268 = vperm.xlu0 %267, %v202
        %v269 = vpop.permute.xlu0 %268
        %272 = vset.pattern.permute.xlu0 0
        %273 = vperm.xlu0 %272, %v203
        %v274 = vpop.permute.xlu0 %273
        %277 = vset.pattern.permute.xlu0 0
        %278 = vperm.xlu0 %277, %v204
        %v279 = vpop.permute.xlu0 %278
        %282 = vset.pattern.permute.xlu0 0
        %283 = vperm.xlu0 %282, %v205
        %v284 = vpop.permute.xlu0 %283
        %vm286 = vcmask 64512
        %v288 = vsel %vm286, %v174, 0
        %v291 = vsel %vm286, %v175, 0
        %v294 = vsel %vm286, %v176, 0
        %v297 = vsel %vm286, %v177, 0
        %v300 = vsel %vm286, %v178, 0
        %v303 = vsel %vm286, %v179, 0
        %v306 = vsel %vm286, %v180, 0
        %v309 = vsel %vm286, %v181, 0
        %v312 = vsel %vm286, %v182, 0
        %v315 = vsel %vm286, %v183, 0
        %v318 = vsel %vm286, %v184, 0
        %v321 = vsel %vm286, %v185, 0
        %v324 = vsel %vm286, %v186, 0
        %v327 = vsel %vm286, %v187, 0
        %v330 = vsel %vm286, %v188, 0
        %v333 = vsel %vm286, %v189, 0
        %335 = vmatprep.subr.mxu0 0.0
        %336 = vmatpush1.msra.mxu0 0.0
        %337 = vmatprep.subr.mxu0 0.0
        %338 = vmatpush1.msra.mxu0 0.0
        %339 = vmatprep.subr.mxu0 0.0
        %340 = vmatpush1.msra.mxu0 0.0
        %341 = vmatprep.subr.mxu0 0.0
        %342 = vmatpush1.msra.mxu0 0.0
        %343 = vmatprep.subr.mxu0 0.0
        %344 = vmatpush1.msra.mxu0 0.0
        %345 = vmatprep.subr.mxu0 0.0
        %346 = vmatpush1.msra.mxu0 0.0
        %347 = vmatprep.subr.mxu0 0.0
        %348 = vmatpush1.msra.mxu0 0.0
        %349 = vmatprep.subr.mxu0 0.0
        %350 = vmatpush1.msra.mxu0 0.0
        %351 = vmatprep.subr.mxu0 0.0
        %352 = vmatpush1.msra.mxu0 0.0
        %353 = vmatprep.subr.mxu0 0.0
        %354 = vmatpush1.msra.mxu0 0.0
        %355 = vmatprep.subr.mxu0 0.0
        %356 = vmatpush1.msra.mxu0 0.0
        %357 = vmatprep.subr.mxu0 0.0
        %358 = vmatpush1.msra.mxu0 0.0
        %359 = vmatprep.subr.mxu0 0.0
        %360 = vmatpush1.msra.mxu0 0.0
        %361 = vmatprep.subr.mxu0 0.0
        %362 = vmatpush1.msra.mxu0 0.0
        %363 = vmatprep.subr.mxu0 0.0
        %364 = vmatpush1.msra.mxu0 0.0
        %365 = vmatprep.subr.mxu0 %v173
        %366 = vmatpush1.msra.mxu0 %v172
        %367 = vmatprep.subr.mxu0 0.0
        %368 = vmatpush2.msra.mxu0 0.0
        %369 = vmatprep.subr.mxu0 0.0
        %370 = vmatpush2.msra.mxu0 0.0
        %371 = vmatprep.subr.mxu0 0.0
        %372 = vmatpush2.msra.mxu0 0.0
        %373 = vmatprep.subr.mxu0 0.0
        %374 = vmatpush2.msra.mxu0 0.0
        %375 = vmatprep.subr.mxu0 0.0
        %376 = vmatpush2.msra.mxu0 0.0
        %377 = vmatprep.subr.mxu0 0.0
        %378 = vmatpush2.msra.mxu0 0.0
        %379 = vmatprep.subr.mxu0 0.0
        %380 = vmatpush2.msra.mxu0 0.0
        %381 = vmatprep.subr.mxu0 0.0
        %382 = vmatpush2.msra.mxu0 0.0
        %383 = vmatprep.subr.mxu0 0.0
        %384 = vmatpush2.msra.mxu0 0.0
        %385 = vmatprep.subr.mxu0 0.0
        %386 = vmatpush2.msra.mxu0 0.0
        %387 = vmatprep.subr.mxu0 0.0
        %388 = vmatpush2.msra.mxu0 0.0
        %389 = vmatprep.subr.mxu0 0.0
        %390 = vmatpush2.msra.mxu0 0.0
        %391 = vmatprep.subr.mxu0 0.0
        %392 = vmatpush2.msra.mxu0 0.0
        %393 = vmatprep.subr.mxu0 0.0
        %394 = vmatpush2.msra.mxu0 0.0
        %395 = vmatprep.subr.mxu0 0.0
        %396 = vmatpush2.msra.mxu0 0.0
        %397 = vmatprep.subr.mxu0 0.0
        %398 = vmatpush2.msra.mxu0 0.0
        %399 = vmatprep.mubr.f32.mxu0 0.0
        %400 = vmatmul.mubr.f32.gmra.mxu0 %v288
        %v401 = vpop.f32.mrf.mxu0
        %v402 = vadd.f32 %v209, %v401
        %v403 = vpop.f32.mrf.mxu0
        %v404 = vadd.f32 %v209, %v403
        %405 = vmatprep.mubr.f32.mxu0 0.0
        %406 = vmatmul.mubr.f32.gmra.mxu0 %v291
        %v407 = vpop.f32.mrf.mxu0
        %v408 = vadd.f32 %v214, %v407
        %v409 = vpop.f32.mrf.mxu0
        %v410 = vadd.f32 %v214, %v409
        %411 = vmatprep.mubr.f32.mxu0 0.0
        %412 = vmatmul.mubr.f32.gmra.mxu0 %v294
        %v413 = vpop.f32.mrf.mxu0
        %v414 = vadd.f32 %v219, %v413
        %v415 = vpop.f32.mrf.mxu0
        %v416 = vadd.f32 %v219, %v415
        %417 = vmatprep.mubr.f32.mxu0 0.0
        %418 = vmatmul.mubr.f32.gmra.mxu0 %v297
        %v419 = vpop.f32.mrf.mxu0
        %v420 = vadd.f32 %v224, %v419
        %v421 = vpop.f32.mrf.mxu0
        %v422 = vadd.f32 %v224, %v421
        %423 = vmatprep.mubr.f32.mxu0 0.0
        %424 = vmatmul.mubr.f32.gmra.mxu0 %v300
        %v425 = vpop.f32.mrf.mxu0
        %v426 = vadd.f32 %v229, %v425
        %v427 = vpop.f32.mrf.mxu0
        %v428 = vadd.f32 %v229, %v427
        %429 = vmatprep.mubr.f32.mxu0 0.0
        %430 = vmatmul.mubr.f32.gmra.mxu0 %v303
        %v431 = vpop.f32.mrf.mxu0
        %v432 = vadd.f32 %v234, %v431
        %v433 = vpop.f32.mrf.mxu0
        %v434 = vadd.f32 %v234, %v433
        %435 = vmatprep.mubr.f32.mxu0 0.0
        %436 = vmatmul.mubr.f32.gmra.mxu0 %v306
        %v437 = vpop.f32.mrf.mxu0
        %v438 = vadd.f32 %v239, %v437
        %v439 = vpop.f32.mrf.mxu0
        %v440 = vadd.f32 %v239, %v439
        %441 = vmatprep.mubr.f32.mxu0 0.0
        %442 = vmatmul.mubr.f32.gmra.mxu0 %v309
        %v443 = vpop.f32.mrf.mxu0
        %v444 = vadd.f32 %v244, %v443
        %v445 = vpop.f32.mrf.mxu0
        %v446 = vadd.f32 %v244, %v445
        %447 = vmatprep.mubr.f32.mxu0 0.0
        %448 = vmatmul.mubr.f32.gmra.mxu0 %v312
        %v449 = vpop.f32.mrf.mxu0
        %v450 = vadd.f32 %v249, %v449
        %v451 = vpop.f32.mrf.mxu0
        %v452 = vadd.f32 %v249, %v451
        %453 = vmatprep.mubr.f32.mxu0 0.0
        %454 = vmatmul.mubr.f32.gmra.mxu0 %v315
        %v455 = vpop.f32.mrf.mxu0
        %v456 = vadd.f32 %v254, %v455
        %v457 = vpop.f32.mrf.mxu0
        %v458 = vadd.f32 %v254, %v457
        %459 = vmatprep.mubr.f32.mxu0 0.0
        %460 = vmatmul.mubr.f32.gmra.mxu0 %v318
        %v461 = vpop.f32.mrf.mxu0
        %v462 = vadd.f32 %v259, %v461
        %v463 = vpop.f32.mrf.mxu0
        %v464 = vadd.f32 %v259, %v463
        %465 = vmatprep.mubr.f32.mxu0 0.0
        %466 = vmatmul.mubr.f32.gmra.mxu0 %v321
        %v467 = vpop.f32.mrf.mxu0
        %v468 = vadd.f32 %v264, %v467
        %v469 = vpop.f32.mrf.mxu0
        %v470 = vadd.f32 %v264, %v469
        %471 = vmatprep.mubr.f32.mxu0 0.0
        %472 = vmatmul.mubr.f32.gmra.mxu0 %v324
        %v473 = vpop.f32.mrf.mxu0
        %v474 = vadd.f32 %v269, %v473
        %v475 = vpop.f32.mrf.mxu0
        %v476 = vadd.f32 %v269, %v475
        %477 = vmatprep.mubr.f32.mxu0 0.0
        %478 = vmatmul.mubr.f32.gmra.mxu0 %v327
        %v479 = vpop.f32.mrf.mxu0
        %v480 = vadd.f32 %v274, %v479
        %v481 = vpop.f32.mrf.mxu0
        %v482 = vadd.f32 %v274, %v481
        %483 = vmatprep.mubr.f32.mxu0 0.0
        %484 = vmatmul.mubr.f32.gmra.mxu0 %v330
        %v485 = vpop.f32.mrf.mxu0
        %v486 = vadd.f32 %v279, %v485
        %v487 = vpop.f32.mrf.mxu0
        %v488 = vadd.f32 %v279, %v487
        %489 = vmatprep.mubr.f32.mxu0 0.0
        %490 = vmatmul.mubr.f32.gmra.mxu0 %v333
        %v491 = vpop.f32.mrf.mxu0
        %v492 = vadd.f32 %v284, %v491
        %v493 = vpop.f32.mrf.mxu0
        %v494 = vadd.f32 %v284, %v493
        %495 = vdwg.mxu0
        %v496 = vmul.f32 %v402, 0.5
        %v497 = vmul.f32 %v404, 0.5
        %v498 = vmul.f32 %v408, 0.5
        %v499 = vmul.f32 %v410, 0.5
        %v500 = vmul.f32 %v414, 0.5
        %v501 = vmul.f32 %v416, 0.5
        %v502 = vmul.f32 %v420, 0.5
        %v503 = vmul.f32 %v422, 0.5
        %v504 = vmul.f32 %v426, 0.5
        %v505 = vmul.f32 %v428, 0.5
        %v506 = vmul.f32 %v432, 0.5
        %v507 = vmul.f32 %v434, 0.5
        %v508 = vmul.f32 %v438, 0.5
        %v509 = vmul.f32 %v440, 0.5
        %v510 = vmul.f32 %v444, 0.5
        %v511 = vmul.f32 %v446, 0.5
        %v512 = vmul.f32 %v450, 0.5
        %v513 = vmul.f32 %v452, 0.5
        %v514 = vmul.f32 %v456, 0.5
        %v515 = vmul.f32 %v458, 0.5
        %v516 = vmul.f32 %v462, 0.5
        %v517 = vmul.f32 %v464, 0.5
        %v518 = vmul.f32 %v468, 0.5
        %v519 = vmul.f32 %v470, 0.5
        %v520 = vmul.f32 %v474, 0.5
        %v521 = vmul.f32 %v476, 0.5
        %v522 = vmul.f32 %v480, 0.5
        %v523 = vmul.f32 %v482, 0.5
        %v524 = vmul.f32 %v486, 0.5
        %v525 = vmul.f32 %v488, 0.5
        %v526 = vmul.f32 %v492, 0.5
        %v527 = vmul.f32 %v494, 0.5
        %v528 = vtanh.pop %v496
        %v529 = vtanh.pop %v497
        %v530 = vtanh.pop %v498
        %v531 = vtanh.pop %v499
        %v532 = vtanh.pop %v500
        %v533 = vtanh.pop %v501
        %v534 = vtanh.pop %v502
        %v535 = vtanh.pop %v503
        %v536 = vtanh.pop %v504
        %v537 = vtanh.pop %v505
        %v538 = vtanh.pop %v506
        %v539 = vtanh.pop %v507
        %v540 = vtanh.pop %v508
        %v541 = vtanh.pop %v509
        %v542 = vtanh.pop %v510
        %v543 = vtanh.pop %v511
        %v544 = vtanh.pop %v512
        %v545 = vtanh.pop %v513
        %v546 = vtanh.pop %v514
        %v547 = vtanh.pop %v515
        %v548 = vtanh.pop %v516
        %v549 = vtanh.pop %v517
        %v550 = vtanh.pop %v518
        %v551 = vtanh.pop %v519
        %v552 = vtanh.pop %v520
        %v553 = vtanh.pop %v521
        %v554 = vtanh.pop %v522
        %v555 = vtanh.pop %v523
        %v556 = vtanh.pop %v524
        %v557 = vtanh.pop %v525
        %v558 = vtanh.pop %v526
        %v559 = vtanh.pop %v527
        %v560 = vmul.f32 %v528, 0.5
        %v561 = vmul.f32 %v529, 0.5
        %v562 = vmul.f32 %v530, 0.5
        %v563 = vmul.f32 %v531, 0.5
        %v564 = vmul.f32 %v532, 0.5
        %v565 = vmul.f32 %v533, 0.5
        %v566 = vmul.f32 %v534, 0.5
        %v567 = vmul.f32 %v535, 0.5
        %v568 = vmul.f32 %v536, 0.5
        %v569 = vmul.f32 %v537, 0.5
        %v570 = vmul.f32 %v538, 0.5
        %v571 = vmul.f32 %v539, 0.5
        %v572 = vmul.f32 %v540, 0.5
        %v573 = vmul.f32 %v541, 0.5
        %v574 = vmul.f32 %v542, 0.5
        %v575 = vmul.f32 %v543, 0.5
        %v576 = vmul.f32 %v544, 0.5
        %v577 = vmul.f32 %v545, 0.5
        %v578 = vmul.f32 %v546, 0.5
        %v579 = vmul.f32 %v547, 0.5
        %v580 = vmul.f32 %v548, 0.5
        %v581 = vmul.f32 %v549, 0.5
        %v582 = vmul.f32 %v550, 0.5
        %v583 = vmul.f32 %v551, 0.5
        %v584 = vmul.f32 %v552, 0.5
        %v585 = vmul.f32 %v553, 0.5
        %v586 = vmul.f32 %v554, 0.5
        %v587 = vmul.f32 %v555, 0.5
        %v588 = vmul.f32 %v556, 0.5
        %v589 = vmul.f32 %v557, 0.5
        %v590 = vmul.f32 %v558, 0.5
        %v591 = vmul.f32 %v559, 0.5
        %v592 = vadd.f32 %v560, 0.5
        %v593 = vadd.f32 %v561, 0.5
        %v594 = vadd.f32 %v562, 0.5
        %v595 = vadd.f32 %v563, 0.5
        %v596 = vadd.f32 %v564, 0.5
        %v597 = vadd.f32 %v565, 0.5
        %v598 = vadd.f32 %v566, 0.5
        %v599 = vadd.f32 %v567, 0.5
        %v600 = vadd.f32 %v568, 0.5
        %v601 = vadd.f32 %v569, 0.5
        %v602 = vadd.f32 %v570, 0.5
        %v603 = vadd.f32 %v571, 0.5
        %v604 = vadd.f32 %v572, 0.5
        %v605 = vadd.f32 %v573, 0.5
        %v606 = vadd.f32 %v574, 0.5
        %v607 = vadd.f32 %v575, 0.5
        %v608 = vadd.f32 %v576, 0.5
        %v609 = vadd.f32 %v577, 0.5
        %v610 = vadd.f32 %v578, 0.5
        %v611 = vadd.f32 %v579, 0.5
        %v612 = vadd.f32 %v580, 0.5
        %v613 = vadd.f32 %v581, 0.5
        %v614 = vadd.f32 %v582, 0.5
        %v615 = vadd.f32 %v583, 0.5
        %v616 = vadd.f32 %v584, 0.5
        %v617 = vadd.f32 %v585, 0.5
        %v618 = vadd.f32 %v586, 0.5
        %v619 = vadd.f32 %v587, 0.5
        %v620 = vadd.f32 %v588, 0.5
        %v621 = vadd.f32 %v589, 0.5
        %v622 = vadd.f32 %v590, 0.5
        %v623 = vadd.f32 %v591, 0.5
        %v624 = vld [vmem:[%s1 + $0x80] sm:$0xff]
        %v625 = vld [vmem:[%s1 + $0x88] sm:$0xff]
        %v626 = vld [vmem:[%s1 + $0x90] sm:$0xff]
        %v627 = vld [vmem:[%s1 + $0x98] sm:$0xff]
        %v628 = vld [vmem:[%s1 + $0xa0] sm:$0xff]
        %v629 = vld [vmem:[%s1 + $0xa8] sm:$0xff]
        %v630 = vld [vmem:[%s1 + $0xb0] sm:$0xff]
        %v631 = vld [vmem:[%s1 + $0xb8] sm:$0xff]
        %v632 = vld [vmem:[%s1 + $0xc0] sm:$0xff]
        %v633 = vld [vmem:[%s1 + $0xc8] sm:$0xff]
        %v634 = vld [vmem:[%s1 + $0xd0] sm:$0xff]
        %v635 = vld [vmem:[%s1 + $0xd8] sm:$0xff]
        %v636 = vld [vmem:[%s1 + $0xe0] sm:$0xff]
        %v637 = vld [vmem:[%s1 + $0xe8] sm:$0xff]
        %v638 = vld [vmem:[%s1 + $0xf0] sm:$0xff]
        %v639 = vld [vmem:[%s1 + $0xf8] sm:$0xff]
        %v640 = vld [vmem:[%s2 + $0x80] sm:$0xff]
        %v641 = vld [vmem:[%s2 + $0x88] sm:$0xff]
        %v642 = vld [vmem:[%s2 + $0x90] sm:$0xff]
        %v643 = vld [vmem:[%s2 + $0x98] sm:$0xff]
        %v644 = vld [vmem:[%s2 + $0xa0] sm:$0xff]
        %v645 = vld [vmem:[%s2 + $0xa8] sm:$0xff]
        %v646 = vld [vmem:[%s2 + $0xb0] sm:$0xff]
        %v647 = vld [vmem:[%s2 + $0xb8] sm:$0xff]
        %v648 = vld [vmem:[%s2 + $0xc0] sm:$0xff]
        %v649 = vld [vmem:[%s2 + $0xc8] sm:$0xff]
        %v650 = vld [vmem:[%s2 + $0xd0] sm:$0xff]
        %v651 = vld [vmem:[%s2 + $0xd8] sm:$0xff]
        %v652 = vld [vmem:[%s2 + $0xe0] sm:$0xff]
        %v653 = vld [vmem:[%s2 + $0xe8] sm:$0xff]
        %v654 = vld [vmem:[%s2 + $0xf0] sm:$0xff]
        %v655 = vld [vmem:[%s2 + $0xf8] sm:$0xff]
        %657 = vset.pattern.permute.xlu0 0
        %658 = vperm.xlu0 %657, %v640
        %v659 = vpop.permute.xlu0 %658
        %662 = vset.pattern.permute.xlu0 0
        %663 = vperm.xlu0 %662, %v641
        %v664 = vpop.permute.xlu0 %663
        %667 = vset.pattern.permute.xlu0 0
        %668 = vperm.xlu0 %667, %v642
        %v669 = vpop.permute.xlu0 %668
        %672 = vset.pattern.permute.xlu0 0
        %673 = vperm.xlu0 %672, %v643
        %v674 = vpop.permute.xlu0 %673
        %677 = vset.pattern.permute.xlu0 0
        %678 = vperm.xlu0 %677, %v644
        %v679 = vpop.permute.xlu0 %678
        %682 = vset.pattern.permute.xlu0 0
        %683 = vperm.xlu0 %682, %v645
        %v684 = vpop.permute.xlu0 %683
        %687 = vset.pattern.permute.xlu0 0
        %688 = vperm.xlu0 %687, %v646
        %v689 = vpop.permute.xlu0 %688
        %692 = vset.pattern.permute.xlu0 0
        %693 = vperm.xlu0 %692, %v647
        %v694 = vpop.permute.xlu0 %693
        %697 = vset.pattern.permute.xlu0 0
        %698 = vperm.xlu0 %697, %v648
        %v699 = vpop.permute.xlu0 %698
        %702 = vset.pattern.permute.xlu0 0
        %703 = vperm.xlu0 %702, %v649
        %v704 = vpop.permute.xlu0 %703
        %707 = vset.pattern.permute.xlu0 0
        %708 = vperm.xlu0 %707, %v650
        %v709 = vpop.permute.xlu0 %708
        %712 = vset.pattern.permute.xlu0 0
        %713 = vperm.xlu0 %712, %v651
        %v714 = vpop.permute.xlu0 %713
        %717 = vset.pattern.permute.xlu0 0
        %718 = vperm.xlu0 %717, %v652
        %v719 = vpop.permute.xlu0 %718
        %722 = vset.pattern.permute.xlu0 0
        %723 = vperm.xlu0 %722, %v653
        %v724 = vpop.permute.xlu0 %723
        %727 = vset.pattern.permute.xlu0 0
        %728 = vperm.xlu0 %727, %v654
        %v729 = vpop.permute.xlu0 %728
        %732 = vset.pattern.permute.xlu0 0
        %733 = vperm.xlu0 %732, %v655
        %v734 = vpop.permute.xlu0 %733
        %736 = vmatprep.subr.mxu0 %v623
        %737 = vmatpush1.msra.mxu0 %v622
        %738 = vmatprep.subr.mxu0 %v621
        %739 = vmatpush1.msra.mxu0 %v620
        %740 = vmatprep.subr.mxu0 %v619
        %741 = vmatpush1.msra.mxu0 %v618
        %742 = vmatprep.subr.mxu0 %v617
        %743 = vmatpush1.msra.mxu0 %v616
        %744 = vmatprep.subr.mxu0 %v615
        %745 = vmatpush1.msra.mxu0 %v614
        %746 = vmatprep.subr.mxu0 %v613
        %747 = vmatpush1.msra.mxu0 %v612
        %748 = vmatprep.subr.mxu0 %v611
        %749 = vmatpush1.msra.mxu0 %v610
        %750 = vmatprep.subr.mxu0 %v609
        %751 = vmatpush1.msra.mxu0 %v608
        %752 = vmatprep.subr.mxu0 %v607
        %753 = vmatpush1.msra.mxu0 %v606
        %754 = vmatprep.subr.mxu0 %v605
        %755 = vmatpush1.msra.mxu0 %v604
        %756 = vmatprep.subr.mxu0 %v603
        %757 = vmatpush1.msra.mxu0 %v602
        %758 = vmatprep.subr.mxu0 %v601
        %759 = vmatpush1.msra.mxu0 %v600
        %760 = vmatprep.subr.mxu0 %v599
        %761 = vmatpush1.msra.mxu0 %v598
        %762 = vmatprep.subr.mxu0 %v597
        %763 = vmatpush1.msra.mxu0 %v596
        %764 = vmatprep.subr.mxu0 %v595
        %765 = vmatpush1.msra.mxu0 %v594
        %766 = vmatprep.subr.mxu0 %v593
        %767 = vmatpush1.msra.mxu0 %v592
        %768 = vmatprep.subr.mxu0 0.0
        %769 = vmatpush2.msra.mxu0 0.0
        %770 = vmatprep.subr.mxu0 0.0
        %771 = vmatpush2.msra.mxu0 0.0
        %772 = vmatprep.subr.mxu0 0.0
        %773 = vmatpush2.msra.mxu0 0.0
        %774 = vmatprep.subr.mxu0 0.0
        %775 = vmatpush2.msra.mxu0 0.0
        %776 = vmatprep.subr.mxu0 0.0
        %777 = vmatpush2.msra.mxu0 0.0
        %778 = vmatprep.subr.mxu0 0.0
        %779 = vmatpush2.msra.mxu0 0.0
        %780 = vmatprep.subr.mxu0 0.0
        %781 = vmatpush2.msra.mxu0 0.0
        %782 = vmatprep.subr.mxu0 0.0
        %783 = vmatpush2.msra.mxu0 0.0
        %784 = vmatprep.subr.mxu0 0.0
        %785 = vmatpush2.msra.mxu0 0.0
        %786 = vmatprep.subr.mxu0 0.0
        %787 = vmatpush2.msra.mxu0 0.0
        %788 = vmatprep.subr.mxu0 0.0
        %789 = vmatpush2.msra.mxu0 0.0
        %790 = vmatprep.subr.mxu0 0.0
        %791 = vmatpush2.msra.mxu0 0.0
        %792 = vmatprep.subr.mxu0 0.0
        %793 = vmatpush2.msra.mxu0 0.0
        %794 = vmatprep.subr.mxu0 0.0
        %795 = vmatpush2.msra.mxu0 0.0
        %796 = vmatprep.subr.mxu0 0.0
        %797 = vmatpush2.msra.mxu0 0.0
        %798 = vmatprep.subr.mxu0 0.0
        %799 = vmatpush2.msra.mxu0 0.0
        %800 = vmatprep.mubr.f32.mxu0 0.0
        %801 = vmatmul.mubr.f32.gmra.mxu0 %v624
        %v802 = vpop.f32.mrf.mxu0
        %v803 = vadd.f32 %v659, %v802
        %v804 = vpop.f32.mrf.mxu0
        %v805 = vadd.f32 %v659, %v804
        %806 = vmatprep.mubr.f32.mxu0 0.0
        %807 = vmatmul.mubr.f32.gmra.mxu0 %v625
        %v808 = vpop.f32.mrf.mxu0
        %v809 = vadd.f32 %v664, %v808
        %v810 = vpop.f32.mrf.mxu0
        %v811 = vadd.f32 %v664, %v810
        %812 = vmatprep.mubr.f32.mxu0 0.0
        %813 = vmatmul.mubr.f32.gmra.mxu0 %v626
        %v814 = vpop.f32.mrf.mxu0
        %v815 = vadd.f32 %v669, %v814
        %v816 = vpop.f32.mrf.mxu0
        %v817 = vadd.f32 %v669, %v816
        %818 = vmatprep.mubr.f32.mxu0 0.0
        %819 = vmatmul.mubr.f32.gmra.mxu0 %v627
        %v820 = vpop.f32.mrf.mxu0
        %v821 = vadd.f32 %v674, %v820
        %v822 = vpop.f32.mrf.mxu0
        %v823 = vadd.f32 %v674, %v822
        %824 = vmatprep.mubr.f32.mxu0 0.0
        %825 = vmatmul.mubr.f32.gmra.mxu0 %v628
        %v826 = vpop.f32.mrf.mxu0
        %v827 = vadd.f32 %v679, %v826
        %v828 = vpop.f32.mrf.mxu0
        %v829 = vadd.f32 %v679, %v828
        %830 = vmatprep.mubr.f32.mxu0 0.0
        %831 = vmatmul.mubr.f32.gmra.mxu0 %v629
        %v832 = vpop.f32.mrf.mxu0
        %v833 = vadd.f32 %v684, %v832
        %v834 = vpop.f32.mrf.mxu0
        %v835 = vadd.f32 %v684, %v834
        %836 = vmatprep.mubr.f32.mxu0 0.0
        %837 = vmatmul.mubr.f32.gmra.mxu0 %v630
        %v838 = vpop.f32.mrf.mxu0
        %v839 = vadd.f32 %v689, %v838
        %v840 = vpop.f32.mrf.mxu0
        %v841 = vadd.f32 %v689, %v840
        %842 = vmatprep.mubr.f32.mxu0 0.0
        %843 = vmatmul.mubr.f32.gmra.mxu0 %v631
        %v844 = vpop.f32.mrf.mxu0
        %v845 = vadd.f32 %v694, %v844
        %v846 = vpop.f32.mrf.mxu0
        %v847 = vadd.f32 %v694, %v846
        %848 = vmatprep.mubr.f32.mxu0 0.0
        %849 = vmatmul.mubr.f32.gmra.mxu0 %v632
        %v850 = vpop.f32.mrf.mxu0
        %v851 = vadd.f32 %v699, %v850
        %v852 = vpop.f32.mrf.mxu0
        %v853 = vadd.f32 %v699, %v852
        %854 = vmatprep.mubr.f32.mxu0 0.0
        %855 = vmatmul.mubr.f32.gmra.mxu0 %v633
        %v856 = vpop.f32.mrf.mxu0
        %v857 = vadd.f32 %v704, %v856
        %v858 = vpop.f32.mrf.mxu0
        %v859 = vadd.f32 %v704, %v858
        %860 = vmatprep.mubr.f32.mxu0 0.0
        %861 = vmatmul.mubr.f32.gmra.mxu0 %v634
        %v862 = vpop.f32.mrf.mxu0
        %v863 = vadd.f32 %v709, %v862
        %v864 = vpop.f32.mrf.mxu0
        %v865 = vadd.f32 %v709, %v864
        %866 = vmatprep.mubr.f32.mxu0 0.0
        %867 = vmatmul.mubr.f32.gmra.mxu0 %v635
        %v868 = vpop.f32.mrf.mxu0
        %v869 = vadd.f32 %v714, %v868
        %v870 = vpop.f32.mrf.mxu0
        %v871 = vadd.f32 %v714, %v870
        %872 = vmatprep.mubr.f32.mxu0 0.0
        %873 = vmatmul.mubr.f32.gmra.mxu0 %v636
        %v874 = vpop.f32.mrf.mxu0
        %v875 = vadd.f32 %v719, %v874
        %v876 = vpop.f32.mrf.mxu0
        %v877 = vadd.f32 %v719, %v876
        %878 = vmatprep.mubr.f32.mxu0 0.0
        %879 = vmatmul.mubr.f32.gmra.mxu0 %v637
        %v880 = vpop.f32.mrf.mxu0
        %v881 = vadd.f32 %v724, %v880
        %v882 = vpop.f32.mrf.mxu0
        %v883 = vadd.f32 %v724, %v882
        %884 = vmatprep.mubr.f32.mxu0 0.0
        %885 = vmatmul.mubr.f32.gmra.mxu0 %v638
        %v886 = vpop.f32.mrf.mxu0
        %v887 = vadd.f32 %v729, %v886
        %v888 = vpop.f32.mrf.mxu0
        %v889 = vadd.f32 %v729, %v888
        %890 = vmatprep.mubr.f32.mxu0 0.0
        %891 = vmatmul.mubr.f32.gmra.mxu0 %v639
        %v892 = vpop.f32.mrf.mxu0
        %v893 = vadd.f32 %v734, %v892
        %v894 = vpop.f32.mrf.mxu0
        %v895 = vadd.f32 %v734, %v894
        %896 = vdwg.mxu0
        %v897 = vmul.f32 %v803, 0.5
        %v898 = vmul.f32 %v805, 0.5
        %v899 = vmul.f32 %v809, 0.5
        %v900 = vmul.f32 %v811, 0.5
        %v901 = vmul.f32 %v815, 0.5
        %v902 = vmul.f32 %v817, 0.5
        %v903 = vmul.f32 %v821, 0.5
        %v904 = vmul.f32 %v823, 0.5
        %v905 = vmul.f32 %v827, 0.5
        %v906 = vmul.f32 %v829, 0.5
        %v907 = vmul.f32 %v833, 0.5
        %v908 = vmul.f32 %v835, 0.5
        %v909 = vmul.f32 %v839, 0.5
        %v910 = vmul.f32 %v841, 0.5
        %v911 = vmul.f32 %v845, 0.5
        %v912 = vmul.f32 %v847, 0.5
        %v913 = vmul.f32 %v851, 0.5
        %v914 = vmul.f32 %v853, 0.5
        %v915 = vmul.f32 %v857, 0.5
        %v916 = vmul.f32 %v859, 0.5
        %v917 = vmul.f32 %v863, 0.5
        %v918 = vmul.f32 %v865, 0.5
        %v919 = vmul.f32 %v869, 0.5
        %v920 = vmul.f32 %v871, 0.5
        %v921 = vmul.f32 %v875, 0.5
        %v922 = vmul.f32 %v877, 0.5
        %v923 = vmul.f32 %v881, 0.5
        %v924 = vmul.f32 %v883, 0.5
        %v925 = vmul.f32 %v887, 0.5
        %v926 = vmul.f32 %v889, 0.5
        %v927 = vmul.f32 %v893, 0.5
        %v928 = vmul.f32 %v895, 0.5
        %v929 = vtanh.pop %v897
        %v930 = vtanh.pop %v898
        %v931 = vtanh.pop %v899
        %v932 = vtanh.pop %v900
        %v933 = vtanh.pop %v901
        %v934 = vtanh.pop %v902
        %v935 = vtanh.pop %v903
        %v936 = vtanh.pop %v904
        %v937 = vtanh.pop %v905
        %v938 = vtanh.pop %v906
        %v939 = vtanh.pop %v907
        %v940 = vtanh.pop %v908
        %v941 = vtanh.pop %v909
        %v942 = vtanh.pop %v910
        %v943 = vtanh.pop %v911
        %v944 = vtanh.pop %v912
        %v945 = vtanh.pop %v913
        %v946 = vtanh.pop %v914
        %v947 = vtanh.pop %v915
        %v948 = vtanh.pop %v916
        %v949 = vtanh.pop %v917
        %v950 = vtanh.pop %v918
        %v951 = vtanh.pop %v919
        %v952 = vtanh.pop %v920
        %v953 = vtanh.pop %v921
        %v954 = vtanh.pop %v922
        %v955 = vtanh.pop %v923
        %v956 = vtanh.pop %v924
        %v957 = vtanh.pop %v925
        %v958 = vtanh.pop %v926
        %v959 = vtanh.pop %v927
        %v960 = vtanh.pop %v928
        %v961 = vmul.f32 %v929, 0.5
        %v962 = vmul.f32 %v930, 0.5
        %v963 = vmul.f32 %v931, 0.5
        %v964 = vmul.f32 %v932, 0.5
        %v965 = vmul.f32 %v933, 0.5
        %v966 = vmul.f32 %v934, 0.5
        %v967 = vmul.f32 %v935, 0.5
        %v968 = vmul.f32 %v936, 0.5
        %v969 = vmul.f32 %v937, 0.5
        %v970 = vmul.f32 %v938, 0.5
        %v971 = vmul.f32 %v939, 0.5
        %v972 = vmul.f32 %v940, 0.5
        %v973 = vmul.f32 %v941, 0.5
        %v974 = vmul.f32 %v942, 0.5
        %v975 = vmul.f32 %v943, 0.5
        %v976 = vmul.f32 %v944, 0.5
        %v977 = vmul.f32 %v945, 0.5
        %v978 = vmul.f32 %v946, 0.5
        %v979 = vmul.f32 %v947, 0.5
        %v980 = vmul.f32 %v948, 0.5
        %v981 = vmul.f32 %v949, 0.5
        %v982 = vmul.f32 %v950, 0.5
        %v983 = vmul.f32 %v951, 0.5
        %v984 = vmul.f32 %v952, 0.5
        %v985 = vmul.f32 %v953, 0.5
        %v986 = vmul.f32 %v954, 0.5
        %v987 = vmul.f32 %v955, 0.5
        %v988 = vmul.f32 %v956, 0.5
        %v989 = vmul.f32 %v957, 0.5
        %v990 = vmul.f32 %v958, 0.5
        %v991 = vmul.f32 %v959, 0.5
        %v992 = vmul.f32 %v960, 0.5
        %v993 = vadd.f32 %v961, 0.5
        %v994 = vadd.f32 %v962, 0.5
        %v995 = vadd.f32 %v963, 0.5
        %v996 = vadd.f32 %v964, 0.5
        %v997 = vadd.f32 %v965, 0.5
        %v998 = vadd.f32 %v966, 0.5
        %v999 = vadd.f32 %v967, 0.5
        %v1000 = vadd.f32 %v968, 0.5
        %v1001 = vadd.f32 %v969, 0.5
        %v1002 = vadd.f32 %v970, 0.5
        %v1003 = vadd.f32 %v971, 0.5
        %v1004 = vadd.f32 %v972, 0.5
        %v1005 = vadd.f32 %v973, 0.5
        %v1006 = vadd.f32 %v974, 0.5
        %v1007 = vadd.f32 %v975, 0.5
        %v1008 = vadd.f32 %v976, 0.5
        %v1009 = vadd.f32 %v977, 0.5
        %v1010 = vadd.f32 %v978, 0.5
        %v1011 = vadd.f32 %v979, 0.5
        %v1012 = vadd.f32 %v980, 0.5
        %v1013 = vadd.f32 %v981, 0.5
        %v1014 = vadd.f32 %v982, 0.5
        %v1015 = vadd.f32 %v983, 0.5
        %v1016 = vadd.f32 %v984, 0.5
        %v1017 = vadd.f32 %v985, 0.5
        %v1018 = vadd.f32 %v986, 0.5
        %v1019 = vadd.f32 %v987, 0.5
        %v1020 = vadd.f32 %v988, 0.5
        %v1021 = vadd.f32 %v989, 0.5
        %v1022 = vadd.f32 %v990, 0.5
        %v1023 = vadd.f32 %v991, 0.5
        %v1024 = vadd.f32 %v992, 0.5
        %v1025 = vld [vmem:[%s1 + $0x100] sm:$0xff]
        %v1026 = vld [vmem:[%s1 + $0x108] sm:$0xff]
        %v1027 = vld [vmem:[%s1 + $0x110] sm:$0xff]
        %v1028 = vld [vmem:[%s1 + $0x118] sm:$0xff]
        %v1029 = vld [vmem:[%s1 + $0x120] sm:$0xff]
        %v1030 = vld [vmem:[%s1 + $0x128] sm:$0xff]
        %v1031 = vld [vmem:[%s1 + $0x130] sm:$0xff]
        %v1032 = vld [vmem:[%s1 + $0x138] sm:$0xff]
        %v1033 = vld [vmem:[%s2 + $0x100] sm:$0xff]
        %v1034 = vld [vmem:[%s2 + $0x108] sm:$0xff]
        %v1035 = vld [vmem:[%s2 + $0x110] sm:$0xff]
        %v1036 = vld [vmem:[%s2 + $0x118] sm:$0xff]
        %v1037 = vld [vmem:[%s2 + $0x120] sm:$0xff]
        %v1038 = vld [vmem:[%s2 + $0x128] sm:$0xff]
        %v1039 = vld [vmem:[%s2 + $0x130] sm:$0xff]
        %v1040 = vld [vmem:[%s2 + $0x138] sm:$0xff]
        %1042 = vset.pattern.permute.xlu0 0
        %1043 = vperm.xlu0 %1042, %v1033
        %v1044 = vpop.permute.xlu0 %1043
        %1047 = vset.pattern.permute.xlu0 0
        %1048 = vperm.xlu0 %1047, %v1034
        %v1049 = vpop.permute.xlu0 %1048
        %1052 = vset.pattern.permute.xlu0 0
        %1053 = vperm.xlu0 %1052, %v1035
        %v1054 = vpop.permute.xlu0 %1053
        %1057 = vset.pattern.permute.xlu0 0
        %1058 = vperm.xlu0 %1057, %v1036
        %v1059 = vpop.permute.xlu0 %1058
        %1062 = vset.pattern.permute.xlu0 0
        %1063 = vperm.xlu0 %1062, %v1037
        %v1064 = vpop.permute.xlu0 %1063
        %1067 = vset.pattern.permute.xlu0 0
        %1068 = vperm.xlu0 %1067, %v1038
        %v1069 = vpop.permute.xlu0 %1068
        %1072 = vset.pattern.permute.xlu0 0
        %1073 = vperm.xlu0 %1072, %v1039
        %v1074 = vpop.permute.xlu0 %1073
        %1077 = vset.pattern.permute.xlu0 0
        %1078 = vperm.xlu0 %1077, %v1040
        %v1079 = vpop.permute.xlu0 %1078
        %1081 = vmatprep.subr.mxu0 %v1024
        %1082 = vmatpush1.msra.mxu0 %v1023
        %1083 = vmatprep.subr.mxu0 %v1022
        %1084 = vmatpush1.msra.mxu0 %v1021
        %1085 = vmatprep.subr.mxu0 %v1020
        %1086 = vmatpush1.msra.mxu0 %v1019
        %1087 = vmatprep.subr.mxu0 %v1018
        %1088 = vmatpush1.msra.mxu0 %v1017
        %1089 = vmatprep.subr.mxu0 %v1016
        %1090 = vmatpush1.msra.mxu0 %v1015
        %1091 = vmatprep.subr.mxu0 %v1014
        %1092 = vmatpush1.msra.mxu0 %v1013
        %1093 = vmatprep.subr.mxu0 %v1012
        %1094 = vmatpush1.msra.mxu0 %v1011
        %1095 = vmatprep.subr.mxu0 %v1010
        %1096 = vmatpush1.msra.mxu0 %v1009
        %1097 = vmatprep.subr.mxu0 %v1008
        %1098 = vmatpush1.msra.mxu0 %v1007
        %1099 = vmatprep.subr.mxu0 %v1006
        %1100 = vmatpush1.msra.mxu0 %v1005
        %1101 = vmatprep.subr.mxu0 %v1004
        %1102 = vmatpush1.msra.mxu0 %v1003
        %1103 = vmatprep.subr.mxu0 %v1002
        %1104 = vmatpush1.msra.mxu0 %v1001
        %1105 = vmatprep.subr.mxu0 %v1000
        %1106 = vmatpush1.msra.mxu0 %v999
        %1107 = vmatprep.subr.mxu0 %v998
        %1108 = vmatpush1.msra.mxu0 %v997
        %1109 = vmatprep.subr.mxu0 %v996
        %1110 = vmatpush1.msra.mxu0 %v995
        %1111 = vmatprep.subr.mxu0 %v994
        %1112 = vmatpush1.msra.mxu0 %v993
        %1113 = vmatprep.subr.mxu0 0.0
        %1114 = vmatpush2.msra.mxu0 0.0
        %1115 = vmatprep.subr.mxu0 0.0
        %1116 = vmatpush2.msra.mxu0 0.0
        %1117 = vmatprep.subr.mxu0 0.0
        %1118 = vmatpush2.msra.mxu0 0.0
        %1119 = vmatprep.subr.mxu0 0.0
        %1120 = vmatpush2.msra.mxu0 0.0
        %1121 = vmatprep.subr.mxu0 0.0
        %1122 = vmatpush2.msra.mxu0 0.0
        %1123 = vmatprep.subr.mxu0 0.0
        %1124 = vmatpush2.msra.mxu0 0.0
        %1125 = vmatprep.subr.mxu0 0.0
        %1126 = vmatpush2.msra.mxu0 0.0
        %1127 = vmatprep.subr.mxu0 0.0
        %1128 = vmatpush2.msra.mxu0 0.0
        %1129 = vmatprep.subr.mxu0 0.0
        %1130 = vmatpush2.msra.mxu0 0.0
        %1131 = vmatprep.subr.mxu0 0.0
        %1132 = vmatpush2.msra.mxu0 0.0
        %1133 = vmatprep.subr.mxu0 0.0
        %1134 = vmatpush2.msra.mxu0 0.0
        %1135 = vmatprep.subr.mxu0 0.0
        %1136 = vmatpush2.msra.mxu0 0.0
        %1137 = vmatprep.subr.mxu0 0.0
        %1138 = vmatpush2.msra.mxu0 0.0
        %1139 = vmatprep.subr.mxu0 0.0
        %1140 = vmatpush2.msra.mxu0 0.0
        %1141 = vmatprep.subr.mxu0 0.0
        %1142 = vmatpush2.msra.mxu0 0.0
        %1143 = vmatprep.subr.mxu0 0.0
        %1144 = vmatpush2.msra.mxu0 0.0
        %1145 = vmatprep.mubr.f32.mxu0 0.0
        %1146 = vmatmul.mubr.f32.gmra.mxu0 %v1025
        %v1147 = vpop.f32.mrf.mxu0
        %v1148 = vadd.f32 %v1044, %v1147
        %v1149 = vpop.f32.mrf.mxu0
        %v1150 = vadd.f32 %v1044, %v1149
        %1151 = vmatprep.mubr.f32.mxu0 0.0
        %1152 = vmatmul.mubr.f32.gmra.mxu0 %v1026
        %v1153 = vpop.f32.mrf.mxu0
        %v1154 = vadd.f32 %v1049, %v1153
        %v1155 = vpop.f32.mrf.mxu0
        %v1156 = vadd.f32 %v1049, %v1155
        %1157 = vmatprep.mubr.f32.mxu0 0.0
        %1158 = vmatmul.mubr.f32.gmra.mxu0 %v1027
        %v1159 = vpop.f32.mrf.mxu0
        %v1160 = vadd.f32 %v1054, %v1159
        %v1161 = vpop.f32.mrf.mxu0
        %v1162 = vadd.f32 %v1054, %v1161
        %1163 = vmatprep.mubr.f32.mxu0 0.0
        %1164 = vmatmul.mubr.f32.gmra.mxu0 %v1028
        %v1165 = vpop.f32.mrf.mxu0
        %v1166 = vadd.f32 %v1059, %v1165
        %v1167 = vpop.f32.mrf.mxu0
        %v1168 = vadd.f32 %v1059, %v1167
        %1169 = vmatprep.mubr.f32.mxu0 0.0
        %1170 = vmatmul.mubr.f32.gmra.mxu0 %v1029
        %v1171 = vpop.f32.mrf.mxu0
        %v1172 = vadd.f32 %v1064, %v1171
        %v1173 = vpop.f32.mrf.mxu0
        %v1174 = vadd.f32 %v1064, %v1173
        %1175 = vmatprep.mubr.f32.mxu0 0.0
        %1176 = vmatmul.mubr.f32.gmra.mxu0 %v1030
        %v1177 = vpop.f32.mrf.mxu0
        %v1178 = vadd.f32 %v1069, %v1177
        %v1179 = vpop.f32.mrf.mxu0
        %v1180 = vadd.f32 %v1069, %v1179
        %1181 = vmatprep.mubr.f32.mxu0 0.0
        %1182 = vmatmul.mubr.f32.gmra.mxu0 %v1031
        %v1183 = vpop.f32.mrf.mxu0
        %v1184 = vadd.f32 %v1074, %v1183
        %v1185 = vpop.f32.mrf.mxu0
        %v1186 = vadd.f32 %v1074, %v1185
        %1187 = vmatprep.mubr.f32.mxu0 0.0
        %1188 = vmatmul.mubr.f32.gmra.mxu0 %v1032
        %v1189 = vpop.f32.mrf.mxu0
        %v1190 = vadd.f32 %v1079, %v1189
        %v1191 = vpop.f32.mrf.mxu0
        %v1192 = vadd.f32 %v1079, %v1191
        %1193 = vdwg.mxu0
        %v1194 = vmul.f32 %v1148, 0.5
        %v1195 = vmul.f32 %v1150, 0.5
        %v1196 = vmul.f32 %v1154, 0.5
        %v1197 = vmul.f32 %v1156, 0.5
        %v1198 = vmul.f32 %v1160, 0.5
        %v1199 = vmul.f32 %v1162, 0.5
        %v1200 = vmul.f32 %v1166, 0.5
        %v1201 = vmul.f32 %v1168, 0.5
        %v1202 = vmul.f32 %v1172, 0.5
        %v1203 = vmul.f32 %v1174, 0.5
        %v1204 = vmul.f32 %v1178, 0.5
        %v1205 = vmul.f32 %v1180, 0.5
        %v1206 = vmul.f32 %v1184, 0.5
        %v1207 = vmul.f32 %v1186, 0.5
        %v1208 = vmul.f32 %v1190, 0.5
        %v1209 = vmul.f32 %v1192, 0.5
        %v1210 = vtanh.pop %v1194
        %v1211 = vtanh.pop %v1195
        %v1212 = vtanh.pop %v1196
        %v1213 = vtanh.pop %v1197
        %v1214 = vtanh.pop %v1198
        %v1215 = vtanh.pop %v1199
        %v1216 = vtanh.pop %v1200
        %v1217 = vtanh.pop %v1201
        %v1218 = vtanh.pop %v1202
        %v1219 = vtanh.pop %v1203
        %v1220 = vtanh.pop %v1204
        %v1221 = vtanh.pop %v1205
        %v1222 = vtanh.pop %v1206
        %v1223 = vtanh.pop %v1207
        %v1224 = vtanh.pop %v1208
        %v1225 = vtanh.pop %v1209
        %v1226 = vmul.f32 %v1210, 0.5
        %v1227 = vmul.f32 %v1211, 0.5
        %v1228 = vmul.f32 %v1212, 0.5
        %v1229 = vmul.f32 %v1213, 0.5
        %v1230 = vmul.f32 %v1214, 0.5
        %v1231 = vmul.f32 %v1215, 0.5
        %v1232 = vmul.f32 %v1216, 0.5
        %v1233 = vmul.f32 %v1217, 0.5
        %v1234 = vmul.f32 %v1218, 0.5
        %v1235 = vmul.f32 %v1219, 0.5
        %v1236 = vmul.f32 %v1220, 0.5
        %v1237 = vmul.f32 %v1221, 0.5
        %v1238 = vmul.f32 %v1222, 0.5
        %v1239 = vmul.f32 %v1223, 0.5
        %v1240 = vmul.f32 %v1224, 0.5
        %v1241 = vmul.f32 %v1225, 0.5
        %v1242 = vadd.f32 %v1226, 0.5
        %v1243 = vadd.f32 %v1227, 0.5
        %v1244 = vadd.f32 %v1228, 0.5
        %v1245 = vadd.f32 %v1229, 0.5
        %v1246 = vadd.f32 %v1230, 0.5
        %v1247 = vadd.f32 %v1231, 0.5
        %v1248 = vadd.f32 %v1232, 0.5
        %v1249 = vadd.f32 %v1233, 0.5
        %v1250 = vadd.f32 %v1234, 0.5
        %v1251 = vadd.f32 %v1235, 0.5
        %v1252 = vadd.f32 %v1236, 0.5
        %v1253 = vadd.f32 %v1237, 0.5
        %v1254 = vadd.f32 %v1238, 0.5
        %v1255 = vadd.f32 %v1239, 0.5
        %v1256 = vadd.f32 %v1240, 0.5
        %v1257 = vadd.f32 %v1241, 0.5
        %v1258 = vld [vmem:[%s1 + $0x140] sm:$0xff]
        %v1259 = vld [vmem:[%s1 + $0x148] sm:$0xff]
        %v1260 = vld [vmem:[%s1 + $0x150] sm:$0xff]
        %v1261 = vld [vmem:[%s1 + $0x158] sm:$0xff]
        %v1262 = vld [vmem:[%s2 + $0x140] sm:$0xff]
        %v1263 = vld [vmem:[%s2 + $0x148] sm:$0xff]
        %v1264 = vld [vmem:[%s2 + $0x150] sm:$0xff]
        %v1265 = vld [vmem:[%s2 + $0x158] sm:$0xff]
        %1267 = vset.pattern.permute.xlu0 0
        %1268 = vperm.xlu0 %1267, %v1262
        %v1269 = vpop.permute.xlu0 %1268
        %1272 = vset.pattern.permute.xlu0 0
        %1273 = vperm.xlu0 %1272, %v1263
        %v1274 = vpop.permute.xlu0 %1273
        %1277 = vset.pattern.permute.xlu0 0
        %1278 = vperm.xlu0 %1277, %v1264
        %v1279 = vpop.permute.xlu0 %1278
        %1282 = vset.pattern.permute.xlu0 0
        %1283 = vperm.xlu0 %1282, %v1265
        %v1284 = vpop.permute.xlu0 %1283
        %vm1286 = vcmask 523264
        %v1288 = vsel %vm1286, %v1258, 0
        %v1291 = vsel %vm1286, %v1259, 0
        %v1294 = vsel %vm1286, %v1260, 0
        %v1297 = vsel %vm1286, %v1261, 0
        %1299 = vmatprep.subr.mxu0 0.0
        %1300 = vmatpush1.msra.mxu0 0.0
        %1301 = vmatprep.subr.mxu0 0.0
        %1302 = vmatpush1.msra.mxu0 0.0
        %1303 = vmatprep.subr.mxu0 0.0
        %1304 = vmatpush1.msra.mxu0 0.0
        %1305 = vmatprep.subr.mxu0 0.0
        %1306 = vmatpush1.msra.mxu0 0.0
        %1307 = vmatprep.subr.mxu0 0.0
        %1308 = vmatpush1.msra.mxu0 0.0
        %1309 = vmatprep.subr.mxu0 0.0
        %1310 = vmatpush1.msra.mxu0 0.0
        %1311 = vmatprep.subr.mxu0 0.0
        %1312 = vmatpush1.msra.mxu0 0.0
        %1313 = vmatprep.subr.mxu0 0.0
        %1314 = vmatpush1.msra.mxu0 0.0
        %1315 = vmatprep.subr.mxu0 %v1257
        %1316 = vmatpush1.msra.mxu0 %v1256
        %1317 = vmatprep.subr.mxu0 %v1255
        %1318 = vmatpush1.msra.mxu0 %v1254
        %1319 = vmatprep.subr.mxu0 %v1253
        %1320 = vmatpush1.msra.mxu0 %v1252
        %1321 = vmatprep.subr.mxu0 %v1251
        %1322 = vmatpush1.msra.mxu0 %v1250
        %1323 = vmatprep.subr.mxu0 %v1249
        %1324 = vmatpush1.msra.mxu0 %v1248
        %1325 = vmatprep.subr.mxu0 %v1247
        %1326 = vmatpush1.msra.mxu0 %v1246
        %1327 = vmatprep.subr.mxu0 %v1245
        %1328 = vmatpush1.msra.mxu0 %v1244
        %1329 = vmatprep.subr.mxu0 %v1243
        %1330 = vmatpush1.msra.mxu0 %v1242
        %1331 = vmatprep.subr.mxu0 0.0
        %1332 = vmatpush2.msra.mxu0 0.0
        %1333 = vmatprep.subr.mxu0 0.0
        %1334 = vmatpush2.msra.mxu0 0.0
        %1335 = vmatprep.subr.mxu0 0.0
        %1336 = vmatpush2.msra.mxu0 0.0
        %1337 = vmatprep.subr.mxu0 0.0
        %1338 = vmatpush2.msra.mxu0 0.0
        %1339 = vmatprep.subr.mxu0 0.0
        %1340 = vmatpush2.msra.mxu0 0.0
        %1341 = vmatprep.subr.mxu0 0.0
        %1342 = vmatpush2.msra.mxu0 0.0
        %1343 = vmatprep.subr.mxu0 0.0
        %1344 = vmatpush2.msra.mxu0 0.0
        %1345 = vmatprep.subr.mxu0 0.0
        %1346 = vmatpush2.msra.mxu0 0.0
        %1347 = vmatprep.subr.mxu0 0.0
        %1348 = vmatpush2.msra.mxu0 0.0
        %1349 = vmatprep.subr.mxu0 0.0
        %1350 = vmatpush2.msra.mxu0 0.0
        %1351 = vmatprep.subr.mxu0 0.0
        %1352 = vmatpush2.msra.mxu0 0.0
        %1353 = vmatprep.subr.mxu0 0.0
        %1354 = vmatpush2.msra.mxu0 0.0
        %1355 = vmatprep.subr.mxu0 0.0
        %1356 = vmatpush2.msra.mxu0 0.0
        %1357 = vmatprep.subr.mxu0 0.0
        %1358 = vmatpush2.msra.mxu0 0.0
        %1359 = vmatprep.subr.mxu0 0.0
        %1360 = vmatpush2.msra.mxu0 0.0
        %1361 = vmatprep.subr.mxu0 0.0
        %1362 = vmatpush2.msra.mxu0 0.0
        %1363 = vmatprep.mubr.f32.mxu0 0.0
        %1364 = vmatmul.mubr.f32.gmra.mxu0 %v1288
        %v1365 = vpop.f32.mrf.mxu0
        %v1366 = vadd.f32 %v1269, %v1365
        %v1367 = vpop.f32.mrf.mxu0
        %v1368 = vadd.f32 %v1269, %v1367
        %1369 = vmatprep.mubr.f32.mxu0 0.0
        %1370 = vmatmul.mubr.f32.gmra.mxu0 %v1291
        %v1371 = vpop.f32.mrf.mxu0
        %v1372 = vadd.f32 %v1274, %v1371
        %v1373 = vpop.f32.mrf.mxu0
        %v1374 = vadd.f32 %v1274, %v1373
        %1375 = vmatprep.mubr.f32.mxu0 0.0
        %1376 = vmatmul.mubr.f32.gmra.mxu0 %v1294
        %v1377 = vpop.f32.mrf.mxu0
        %v1378 = vadd.f32 %v1279, %v1377
        %v1379 = vpop.f32.mrf.mxu0
        %v1380 = vadd.f32 %v1279, %v1379
        %1381 = vmatprep.mubr.f32.mxu0 0.0
        %1382 = vmatmul.mubr.f32.gmra.mxu0 %v1297
        %v1383 = vpop.f32.mrf.mxu0
        %v1384 = vadd.f32 %v1284, %v1383
        %v1385 = vpop.f32.mrf.mxu0
        %v1386 = vadd.f32 %v1284, %v1385
        %1387 = vdwg.mxu0
        %v1388 = vmul.f32 %v1366, 0.5
        %v1389 = vmul.f32 %v1368, 0.5
        %v1390 = vmul.f32 %v1372, 0.5
        %v1391 = vmul.f32 %v1374, 0.5
        %v1392 = vmul.f32 %v1378, 0.5
        %v1393 = vmul.f32 %v1380, 0.5
        %v1394 = vmul.f32 %v1384, 0.5
        %v1395 = vmul.f32 %v1386, 0.5
        %v1396 = vtanh.pop %v1388
        %v1397 = vtanh.pop %v1389
        %v1398 = vtanh.pop %v1390
        %v1399 = vtanh.pop %v1391
        %v1400 = vtanh.pop %v1392
        %v1401 = vtanh.pop %v1393
        %v1402 = vtanh.pop %v1394
        %v1403 = vtanh.pop %v1395
        %v1404 = vmul.f32 %v1396, 0.5
        %v1405 = vmul.f32 %v1397, 0.5
        %v1406 = vmul.f32 %v1398, 0.5
        %v1407 = vmul.f32 %v1399, 0.5
        %v1408 = vmul.f32 %v1400, 0.5
        %v1409 = vmul.f32 %v1401, 0.5
        %v1410 = vmul.f32 %v1402, 0.5
        %v1411 = vmul.f32 %v1403, 0.5
        %v1412 = vadd.f32 %v1404, 0.5
        %v1413 = vadd.f32 %v1405, 0.5
        %v1414 = vadd.f32 %v1406, 0.5
        %v1415 = vadd.f32 %v1407, 0.5
        %v1416 = vadd.f32 %v1408, 0.5
        %v1417 = vadd.f32 %v1409, 0.5
        %v1418 = vadd.f32 %v1410, 0.5
        %v1419 = vadd.f32 %v1411, 0.5
        %v1420 = vld [vmem:[%s2 + $0x168] sm:$0xff]
        %v1421 = vld [vmem:[%s2 + $0x170] sm:$0xff]
        %v1422 = vld [vmem:[%s2 + $0x178] sm:$0xff]
        %v1423 = vld [vmem:[%s2 + $0x180] sm:$0xff]
        %v1424 = vld [vmem:[%s2 + $0x160] sm:$0x1]
        %1426 = vset.pattern.permute.xlu0 0
        %1427 = vperm.xlu0 %1426, %v1420
        %v1428 = vpop.permute.xlu0 %1427
        %1431 = vset.pattern.permute.xlu0 0
        %1432 = vperm.xlu0 %1431, %v1421
        %v1433 = vpop.permute.xlu0 %1432
        %1436 = vset.pattern.permute.xlu0 0
        %1437 = vperm.xlu0 %1436, %v1422
        %v1438 = vpop.permute.xlu0 %1437
        %1441 = vset.pattern.permute.xlu0 0
        %1442 = vperm.xlu0 %1441, %v1423
        %v1443 = vpop.permute.xlu0 %1442
        %v1445 = vmul.f32 %v1428, %v1412
        %v1446 = vmul.f32 %v1428, %v1413
        %v1447 = vmul.f32 %v1433, %v1414
        %v1448 = vmul.f32 %v1433, %v1415
        %v1449 = vmul.f32 %v1438, %v1416
        %v1450 = vmul.f32 %v1438, %v1417
        %v1451 = vmul.f32 %v1443, %v1418
        %v1452 = vmul.f32 %v1443, %v1419
        %v1453 = vadd.f32 %v1445, %v1447
        %v1454 = vadd.f32 %v1453, %v1449
        %v1455 = vadd.f32 %v1454, %v1451
        %v1456 = vrot.slane %v1455, 4
        %v1457 = vadd.f32 %v1455, %v1456
        %v1458 = vrot.slane %v1457, 2
        %v1459 = vadd.f32 %v1457, %v1458
        %v1460 = vrot.slane %v1459, 1
        %v1461 = vadd.f32 %v1459, %v1460
        %v1462 = vadd.f32 %v1446, %v1448
        %v1463 = vadd.f32 %v1462, %v1450
        %v1464 = vadd.f32 %v1463, %v1452
        %v1465 = vrot.slane %v1464, 4
        %v1466 = vadd.f32 %v1464, %v1465
        %v1467 = vrot.slane %v1466, 2
        %v1468 = vadd.f32 %v1466, %v1467
        %v1469 = vrot.slane %v1468, 1
        %v1470 = vadd.f32 %v1468, %v1469
        %1472 = vset.pattern.permute.xlu0 0
        %1473 = vperm.xlu0 %1472, %v1424
        %v1474 = vpop.permute.xlu0 %1473
        %v1476 = vadd.f32 %v1461, %v1474
        %v1477 = vadd.f32 %v1470, %v1474
        %v1478 = vmul.f32 %v1476, 0.5
        %v1479 = vmul.f32 %v1477, 0.5
        %v1480 = vtanh.pop %v1478
        %v1481 = vtanh.pop %v1479
        %v1482 = vmul.f32 %v1480, 0.5
        %v1483 = vmul.f32 %v1481, 0.5
        %v1484 = vadd.f32 %v1482, 0.5
        %v1485 = vadd.f32 %v1483, 0.5
        %v1488 = vcombine.low %v1484, %v1485
        %v1490 = vunpack.c.l.s4 1966171168
        %v1491 = vunpack.c.0.s8 %v1490
        %v1492 = vlaneseq
        %v1493 = vshrl.u32 %v1492, 7
        %v1494 = vsub.s32 %v1491, %v1493
        %v1495 = vrot.slane %v1488, %v1494
        %v1497 = vunpack.c.l.s4 1966171168
        %v1498 = vunpack.c.0.s8 %v1497
        %v1499 = vlaneseq
        %v1500 = vshrl.u32 %v1499, 7
        %v1501 = vsub.s32 %v1498, %v1500
        %v1502 = vrot.slane %v1495, %v1501
        %v1504 = vlaneseq
        %vm1505 = vcmp.ge.s32.totalorder %v1504, 0
        %vm1506 = vcmp.lt.s32.totalorder %v1504, 256
        %vm1507 = vmand %vm1505, %vm1506
        %1508 = vst.msk [vmem:[%s164] sm:$0x3] %vm1507, %v1502
        %s1509 = sand.u32 %s93, 1
        %s1510 = scalar_lea.sflag [#allocation3], %s1509
        %s1511 = sand.u32 %s93, 1
        %s1512 = smul.addr %s1511, 2
        %s1513 = scalar_lea.vmem [#allocation2], %s1512
        // Predicated region
        $region33: #{tpu_custom_call.1} parent=31 // pred_check
          %p1514 = pneg %p103
        $region34: #{tpu_custom_call.1} parent=31 // pred_check_branch
          %1516 = sbr.rel (%p1514) target = $region36
        $region35: #{tpu_custom_call.1} parent=31 // pred_region
          %s1517 = smul.u32 2, %s17
          %s1519 = ssub.s32 32, 32
          %1520 = vsyncadd %s1510, %s1519
          %s1521 = smul.addr %s1517, 16
          %s1522 = scalar_lea.hbm %s3, %s1521
          %s1524 = sshll.u32 %s1513, 4
          %s1525 = int_to_ptr.vmem [resolvable:$true] %s1524
          %1527 = dma.vmem_to_hbm [thread:$0]  %s1525, 32, %s1522, %s1510
        $region36: #{tpu_custom_call.1} parent=31 // pred_fallthru
          _
      $region32: #{tpu_custom_call.1} parent=5 // pred_fallthru
        _
      %p1528 = scmp.le.s32.totalorder 2, %s12
      // Predicated region
      $region37: #{tpu_custom_call.1} parent=5 // pred_check
        %p1529 = pneg %p1528
      $region38: #{tpu_custom_call.1} parent=5 // pred_check_branch
        %1531 = sbr.rel (%p1529) target = $region40
      $region39: #{tpu_custom_call.1} parent=5 // pred_region
        %s1532 = ssub.s32 %s12, 2
        // Predicated region
        $region41: #{tpu_custom_call.1} parent=39 // pred_check
          %p1533 = pneg %p109
        $region42: #{tpu_custom_call.1} parent=39 // pred_check_branch
          %1535 = sbr.rel (%p1533) target = $region44
        $region43: #{tpu_custom_call.1} parent=39 // pred_region
          %s1536 = sand.u32 %s94, 1
          %s1537 = scalar_lea.sflag [#allocation3], %s1536
          %s1538 = sand.u32 %s94, 1
          %s1539 = smul.addr %s1538, 2
          %s1540 = scalar_lea.vmem [#allocation2], %s1539
          %1541 = dma.done %s1537, 32
        $region44: #{tpu_custom_call.1} parent=39 // pred_fallthru
          _
      $region40: #{tpu_custom_call.1} parent=5 // pred_fallthru
        _
    $region6: #{tpu_custom_call.1} parent=1 // loop_footer
      %s16 = sadd.s32 1, %s12
    $region7: #{tpu_custom_call.1} parent=1 // loop_footer_branch
      %11 = sbr.rel target = $region3
    $region8: #{tpu_custom_call.1} parent=1 // loop_exit
      _
    %1542 = vsyncpa [#allocation3], 1
    %s1543 = scalar_lea.sflag [#allocation3], 1
    %1544 = vsyncpa %s1543, 1

</llo_original>
